<compile_context>
chip_gen: v7x
topology: tpu7x:2x2x1
jax: 0.10.0
libtpu: 0.0.40
codegen_flags: <defaults>
</compile_context>

<pallas_src>
import jax
import jax.numpy as jnp
import numpy as np
from jax.experimental import pallas as pl
from jax.experimental.pallas import tpu as pltpu


# ---------------------------------------------------------------------------
# One-time parameter preparation (hoisted out of the forward pass)
# ---------------------------------------------------------------------------
def prepare_mhsa_params(gamma, beta, wqkv, bqkv, wo, bo, *, head):
    """Fold LayerNorm affine + attention scale into the projection weights.

    Returns (w_qkv, b_qkv, w_o, b_o):
      w_qkv : (3, dim, dim)  q/k/v weights, output features head-major,
                             gamma folded in, q additionally scaled by hd^-0.5
      b_qkv : (3, 1, dim)    matching biases (beta @ W + b, q scaled)
      w_o   : (dim, dim)     output projection (input axis head-major, as in torch)
      b_o   : (1, dim)
    """
    dim = wqkv.shape[0]
    head_dim = dim // head
    assert head * head_dim == dim
    scale = head_dim ** (-0.5)

    g = gamma.reshape(dim)
    bt = beta.reshape(dim)

    # torch's qkv output feature order is (qkv, head, head_dim); keep it.
    w3 = wqkv.reshape(dim, 3, dim)
    b3 = bqkv.reshape(3, dim)

    def fold(wi, bi, s):
        w_f = (g[:, None] * wi) * s          # diag(gamma) @ W * s
        b_f = (bt @ wi + bi) * s             # (beta @ W + b) * s
        return w_f, b_f

    wq, bq = fold(w3[:, 0, :], b3[0], scale)   # scale folded into q only
    wk, bk = fold(w3[:, 1, :], b3[1], 1.0)
    wv, bv = fold(w3[:, 2, :], b3[2], 1.0)

    w_qkv = jnp.stack([wq, wk, wv])                        # (3, dim, dim)
    b_qkv = jnp.stack([bq, bk, bv]).reshape(3, 1, dim)     # (3, 1, dim)
    return w_qkv, b_qkv, wo, bo.reshape(1, dim)


# ---------------------------------------------------------------------------
# Grid sizing (generation-aware, per review)
# ---------------------------------------------------------------------------
def _tensorcores_per_chip():
    # Best-effort detection: v4 / v5p / v7x expose 2 TensorCores per chip
    # (a "parallel" grid axis shards across them); v5e / v6e are single-TC,
    # where any grid split is a purely serial loop.
    try:
        kind = jax.devices()[0].device_kind.lower()
    except Exception:
        return 1
    return 2 if any(t in kind for t in ("v4", "v5p", "v7")) else 1


def _pick_num_blocks(B, n):
    # Keep m = b_block*n large (fill the 128/256-row MXU); only split 2-way
    # on multi-TC chips and only when each half still has >= 128 rows.
    if _tensorcores_per_chip() >= 2 and B % 2 == 0 and (B // 2) * n >= 128:
        return 2
    return 1


# ---------------------------------------------------------------------------
# Kernel
# ---------------------------------------------------------------------------
def make_mhsa_kernel(b_block, n, dim, head, eps=1e-5):
    head_dim = dim // head
    assert head * head_dim == dim
    m = b_block * n                      # rows processed per grid step

    def kernel(x_ref, wqkv_ref, bqkv_ref, wo_ref, bo_ref, o_ref):
        # ---- flatten batch block: (b_block, n, dim) -> (m, dim) (free) ----
        x = x_ref[...].reshape(m, dim)

        # ---- LayerNorm core (affine folded into the projection weights) ----
        mean = jnp.mean(x, axis=-1, keepdims=True)
        xc = x - mean
        var = jnp.mean(xc * xc, axis=-1, keepdims=True)
        xn = xc * jax.lax.rsqrt(var + eps)                 # (m, dim)

        # ---- Q / K / V: three (m,dim)@(dim,dim) matmuls sharing the LHS ----
        # (gamma and the q-scale are already folded into wqkv / bqkv)
        q = jnp.dot(xn, wqkv_ref[0], preferred_element_type=jnp.float32) + bqkv_ref[0]
        k = jnp.dot(xn, wqkv_ref[1], preferred_element_type=jnp.float32) + bqkv_ref[1]
        v = jnp.dot(xn, wqkv_ref[2], preferred_element_type=jnp.float32) + bqkv_ref[2]

        # ---- per-head attention (heads live in 16-lane slices of dim) ----
        heads_out = []
        for h in range(head):
            lo = h * head_dim
            hi = lo + head_dim
            qh = q[:, lo:hi].reshape(b_block, n, head_dim)
            kh = k[:, lo:hi].reshape(b_block, n, head_dim)
            vh = v[:, lo:hi].reshape(b_block, n, head_dim)

            s = jnp.einsum('bqd,bkd->bqk', qh, kh,
                           preferred_element_type=jnp.float32)   # (b, n, n)
            s = s - jnp.max(s, axis=-1, keepdims=True)
            p = jnp.exp(s)
            p = p * pl.reciprocal(jnp.sum(p, axis=-1, keepdims=True), approx=True)
            oh = jnp.einsum('bqk,bkd->bqd', p, vh,
                            preferred_element_type=jnp.float32)  # (b, n, hd)
            heads_out.append(oh.reshape(m, head_dim))

        # ---- fused output projection: concat heads (lane relayout) + 1 matmul
        o_cat = jnp.concatenate(heads_out, axis=-1)               # (m, dim), head-major
        out = jnp.dot(o_cat, wo_ref[...],
                      preferred_element_type=jnp.float32) + bo_ref[...]

        # dropout = identity (eval mode)
        o_ref[...] = out.reshape(b_block, n, dim)

    return kernel


# ---------------------------------------------------------------------------
# Wrapper
# ---------------------------------------------------------------------------
def mhsa_forward(x, params, *, head):
    w_qkv, b_qkv, w_o, b_o = params
    B, n, dim = x.shape

    num_blocks = _pick_num_blocks(B, n)
    b_block = B // num_blocks

    kernel = make_mhsa_kernel(b_block, n, dim, head)

    c2 = lambda b: (0, 0)
    c3 = lambda b: (0, 0, 0)
    return pl.pallas_call(
        kernel,
        out_shape=jax.ShapeDtypeStruct((B, n, dim), jnp.float32),
        grid_spec=pltpu.PrefetchScalarGridSpec(
            num_scalar_prefetch=0,
            grid=(num_blocks,),
            in_specs=[
                pl.BlockSpec((b_block, n, dim), lambda b: (b, 0, 0)),  # x
                pl.BlockSpec((3, dim, dim), c3),                       # W_q/k/v (folded)
                pl.BlockSpec((3, 1, dim), c3),                         # b_q/k/v (folded)
                pl.BlockSpec((dim, dim), c2),                          # W_o
                pl.BlockSpec((1, dim), c2),                            # b_o
            ],
            out_specs=pl.BlockSpec((b_block, n, dim), lambda b: (b, 0, 0)),
        ),
        compiler_params=pltpu.CompilerParams(
            dimension_semantics=("parallel",) if num_blocks > 1 else ("arbitrary",)),
    )(x, w_qkv, b_qkv, w_o, b_o)


# ---------------------------------------------------------------------------
# Pure-JAX reference (mirrors the PyTorch module)
# ---------------------------------------------------------------------------
def mhsa_reference(x, gamma, beta, wqkv, bqkv, wo, bo, *, head):
    B, n, dim = x.shape
    hd = dim // head
    mean = jnp.mean(x, axis=-1, keepdims=True)
    var = jnp.mean((x - mean) ** 2, axis=-1, keepdims=True)
    xn = (x - mean) * jax.lax.rsqrt(var + 1e-5) * gamma[0] + beta[0]
    qkv = xn @ wqkv + bqkv[0]                         # (B, n, 3*dim)
    qkv = qkv.reshape(B, n, 3, head, hd).transpose(2, 0, 3, 1, 4)
    q, k, v = qkv[0], qkv[1], qkv[2]                  # (B, head, n, hd)
    attn = jax.nn.softmax(
        jnp.einsum('bhnd,bhmd->bhnm', q, k) * hd ** (-0.5), axis=-1)
    out = jnp.einsum('bhnm,bhmd->bhnd', attn, v)
    out = out.transpose(0, 2, 1, 3).reshape(B, n, dim)
    return out @ wo + bo[0]


if __name__ == "__main__":
    # Module config: patch_num=4 -> n=16, patch_size=8 -> dim=64, head=4
    patch_num, patch_size, head = 4, 8, 4
    n, dim = patch_num * patch_num, patch_size ** 2
    B = 2

    key = jax.random.PRNGKey(0)
    kx, kw1, kb1, kw2, kb2 = jax.random.split(key, 5)

    x = jax.random.normal(kx, (B, n, dim), dtype=jnp.float32)
    gamma = jnp.ones((1, dim), jnp.float32)            # LayerNorm weight
    beta = jnp.zeros((1, dim), jnp.float32)            # LayerNorm bias
    wqkv = jax.random.normal(kw1, (dim, 3 * dim), jnp.float32) * 0.05
    bqkv = jax.random.normal(kb1, (1, 3 * dim), jnp.float32) * 0.05
    wo = jax.random.normal(kw2, (dim, dim), jnp.float32) * 0.05
    bo = jax.random.normal(kb2, (1, dim), jnp.float32) * 0.05

    # One-time weight folding / repacking (hoisted out of the forward pass).
    params = prepare_mhsa_params(gamma, beta, wqkv, bqkv, wo, bo, head=head)
    params = jax.tree_util.tree_map(jax.block_until_ready, params)

    out = mhsa_forward(x, params, head=head)
    out = jax.block_until_ready(out)

    ref = mhsa_reference(x, gamma, beta, wqkv, bqkv, wo, bo, head=head)
    # Tolerance accounts for the EUP approximate reciprocal in the softmax
    # denominator and the re-associated (folded/fused) matmuls.
    np.testing.assert_allclose(np.asarray(out), np.asarray(ref),
                               rtol=1e-3, atol=1e-3)
    print("KERNEL_OK")
</pallas_src>

<mosaic_0001>
module attributes {stable_mosaic.version = 11 : i64} {
  func.func @kernel(%arg0: i32, %arg1: memref<2x16x64xf32, #tpu.memory_space<vmem>>, %arg2: memref<3x64x64xf32, #tpu.memory_space<vmem>>, %arg3: memref<3x1x64xf32, #tpu.memory_space<vmem>>, %arg4: memref<64x64xf32, #tpu.memory_space<vmem>>, %arg5: memref<1x64xf32, #tpu.memory_space<vmem>>, %arg6: memref<2x16x64xf32, #tpu.memory_space<vmem>>) attributes {dimension_semantics = [#tpu.dimension_semantics<arbitrary>], iteration_bounds = array<i64: 1>, scalar_prefetch = 0 : i64, scratch_operands = 0 : i64, tpu.core_type = #tpu.core_type<tc>, window_params = [{transform_indices = @transform_0, window_bounds = array<i64: 2, 16, 64>}, {pipeline_mode = #tpu.pipeline_mode<synchronous>, transform_indices = @transform_1, window_bounds = array<i64: 3, 64, 64>}, {pipeline_mode = #tpu.pipeline_mode<synchronous>, transform_indices = @transform_2, window_bounds = array<i64: 3, 1, 64>}, {pipeline_mode = #tpu.pipeline_mode<synchronous>, transform_indices = @transform_3, window_bounds = array<i64: 64, 64>}, {pipeline_mode = #tpu.pipeline_mode<synchronous>, transform_indices = @transform_4, window_bounds = array<i64: 1, 64>}, {transform_indices = @transform_5, window_bounds = array<i64: 2, 16, 64>}]} {
    %c0 = arith.constant 0 : index
    %c0_0 = arith.constant 0 : index
    %c0_1 = arith.constant 0 : index
    %0 = vector.load %arg1[%c0, %c0_0, %c0_1] : memref<2x16x64xf32, #tpu.memory_space<vmem>>, vector<2x16x64xf32>
    %1 = vector.shape_cast %0 : vector<2x16x64xf32> to vector<32x64xf32>
    %cst = arith.constant dense<0.000000e+00> : vector<32xf32>
    %2 = vector.multi_reduction <add>, %1, %cst [1] : vector<32x64xf32> to vector<32xf32>
    %3 = vector.shape_cast %2 : vector<32xf32> to vector<32x1xf32>
    %cst_2 = arith.constant 6.400000e+01 : f32
    %4 = vector.broadcast %cst_2 : f32 to vector<32x1xf32>
    %5 = arith.divf %3, %4 : vector<32x1xf32>
    %6 = vector.broadcast %5 : vector<32x1xf32> to vector<32x64xf32>
    %7 = arith.subf %1, %6 : vector<32x64xf32>
    %8 = arith.mulf %7, %7 : vector<32x64xf32>
    %cst_3 = arith.constant dense<0.000000e+00> : vector<32xf32>
    %9 = vector.multi_reduction <add>, %8, %cst_3 [1] : vector<32x64xf32> to vector<32xf32>
    %10 = vector.shape_cast %9 : vector<32xf32> to vector<32x1xf32>
    %cst_4 = arith.constant 6.400000e+01 : f32
    %11 = vector.broadcast %cst_4 : f32 to vector<32x1xf32>
    %12 = arith.divf %10, %11 : vector<32x1xf32>
    %cst_5 = arith.constant 9.99999974E-6 : f32
    %13 = vector.broadcast %cst_5 : f32 to vector<32x1xf32>
    %14 = arith.addf %12, %13 : vector<32x1xf32>
    %15 = math.rsqrt %14 : vector<32x1xf32>
    %16 = vector.broadcast %15 : vector<32x1xf32> to vector<32x64xf32>
    %17 = arith.mulf %7, %16 : vector<32x64xf32>
    %c0_6 = arith.constant 0 : index
    %c0_7 = arith.constant 0 : index
    %c0_8 = arith.constant 0 : index
    %18 = vector.load %arg2[%c0_6, %c0_7, %c0_8] : memref<3x64x64xf32, #tpu.memory_space<vmem>>, vector<1x64x64xf32>
    %19 = vector.shape_cast %18 : vector<1x64x64xf32> to vector<64x64xf32>
    %cst_9 = arith.constant dense<0.000000e+00> : vector<32x64xf32>
    %20 = tpu.matmul %17, %19, %cst_9 {dimension_numbers = #tpu.dot_dimension_numbers<[1], [0], [0], [1], [0, 0, 1, 1], [], []>} : vector<32x64xf32>, vector<64x64xf32>, vector<32x64xf32> -> vector<32x64xf32>
    %c0_10 = arith.constant 0 : index
    %c0_11 = arith.constant 0 : index
    %c0_12 = arith.constant 0 : index
    %21 = vector.load %arg3[%c0_10, %c0_11, %c0_12] : memref<3x1x64xf32, #tpu.memory_space<vmem>>, vector<1x1x64xf32>
    %22 = vector.shape_cast %21 : vector<1x1x64xf32> to vector<1x64xf32>
    %23 = vector.broadcast %22 : vector<1x64xf32> to vector<32x64xf32>
    %24 = arith.addf %20, %23 : vector<32x64xf32>
    %c1 = arith.constant 1 : index
    %c0_13 = arith.constant 0 : index
    %c0_14 = arith.constant 0 : index
    %25 = vector.load %arg2[%c1, %c0_13, %c0_14] : memref<3x64x64xf32, #tpu.memory_space<vmem>>, vector<1x64x64xf32>
    %26 = vector.shape_cast %25 : vector<1x64x64xf32> to vector<64x64xf32>
    %cst_15 = arith.constant dense<0.000000e+00> : vector<32x64xf32>
    %27 = tpu.matmul %17, %26, %cst_15 {dimension_numbers = #tpu.dot_dimension_numbers<[1], [0], [0], [1], [0, 0, 1, 1], [], []>} : vector<32x64xf32>, vector<64x64xf32>, vector<32x64xf32> -> vector<32x64xf32>
    %c1_16 = arith.constant 1 : index
    %c0_17 = arith.constant 0 : index
    %c0_18 = arith.constant 0 : index
    %28 = vector.load %arg3[%c1_16, %c0_17, %c0_18] : memref<3x1x64xf32, #tpu.memory_space<vmem>>, vector<1x1x64xf32>
    %29 = vector.shape_cast %28 : vector<1x1x64xf32> to vector<1x64xf32>
    %30 = vector.broadcast %29 : vector<1x64xf32> to vector<32x64xf32>
    %31 = arith.addf %27, %30 : vector<32x64xf32>
    %c2 = arith.constant 2 : index
    %c0_19 = arith.constant 0 : index
    %c0_20 = arith.constant 0 : index
    %32 = vector.load %arg2[%c2, %c0_19, %c0_20] : memref<3x64x64xf32, #tpu.memory_space<vmem>>, vector<1x64x64xf32>
    %33 = vector.shape_cast %32 : vector<1x64x64xf32> to vector<64x64xf32>
    %cst_21 = arith.constant dense<0.000000e+00> : vector<32x64xf32>
    %34 = tpu.matmul %17, %33, %cst_21 {dimension_numbers = #tpu.dot_dimension_numbers<[1], [0], [0], [1], [0, 0, 1, 1], [], []>} : vector<32x64xf32>, vector<64x64xf32>, vector<32x64xf32> -> vector<32x64xf32>
    %c2_22 = arith.constant 2 : index
    %c0_23 = arith.constant 0 : index
    %c0_24 = arith.constant 0 : index
    %35 = vector.load %arg3[%c2_22, %c0_23, %c0_24] : memref<3x1x64xf32, #tpu.memory_space<vmem>>, vector<1x1x64xf32>
    %36 = vector.shape_cast %35 : vector<1x1x64xf32> to vector<1x64xf32>
    %37 = vector.broadcast %36 : vector<1x64xf32> to vector<32x64xf32>
    %38 = arith.addf %34, %37 : vector<32x64xf32>
    %39 = vector.extract_strided_slice %24 {offsets = [0, 0], sizes = [32, 16], strides = [1, 1]} : vector<32x64xf32> to vector<32x16xf32>
    %40 = vector.shape_cast %39 : vector<32x16xf32> to vector<2x16x16xf32>
    %41 = vector.extract_strided_slice %31 {offsets = [0, 0], sizes = [32, 16], strides = [1, 1]} : vector<32x64xf32> to vector<32x16xf32>
    %42 = vector.shape_cast %41 : vector<32x16xf32> to vector<2x16x16xf32>
    %43 = vector.extract_strided_slice %38 {offsets = [0, 0], sizes = [32, 16], strides = [1, 1]} : vector<32x64xf32> to vector<32x16xf32>
    %44 = vector.shape_cast %43 : vector<32x16xf32> to vector<2x16x16xf32>
    "tpu.trace_start"() <{level = 10 : i32, message = "bqd,bkd->bqk"}> : () -> ()
    %cst_25 = arith.constant dense<0.000000e+00> : vector<2x16x16xf32>
    %45 = tpu.matmul %40, %42, %cst_25 {dimension_numbers = #tpu.dot_dimension_numbers<[2], [2], [1], [1], [0, 0, 0, 1, 1, 1], [0], [0]>} : vector<2x16x16xf32>, vector<2x16x16xf32>, vector<2x16x16xf32> -> vector<2x16x16xf32>
    "tpu.trace_stop"() : () -> ()
    %cst_26 = arith.constant dense<0xFF800000> : vector<2x16xf32>
    %46 = vector.multi_reduction <maximumf>, %45, %cst_26 [2] : vector<2x16x16xf32> to vector<2x16xf32>
    %47 = vector.shape_cast %46 : vector<2x16xf32> to vector<2x16x1xf32>
    %48 = vector.broadcast %47 : vector<2x16x1xf32> to vector<2x16x16xf32>
    %49 = arith.subf %45, %48 : vector<2x16x16xf32>
    %50 = math.exp %49 : vector<2x16x16xf32>
    %cst_27 = arith.constant dense<0.000000e+00> : vector<2x16xf32>
    %51 = vector.multi_reduction <add>, %50, %cst_27 [2] : vector<2x16x16xf32> to vector<2x16xf32>
    %52 = vector.shape_cast %51 : vector<2x16xf32> to vector<2x16x1xf32>
    %53 = tpu.reciprocal %52 {approx = true} : vector<2x16x1xf32> -> vector<2x16x1xf32>
    %54 = vector.broadcast %53 : vector<2x16x1xf32> to vector<2x16x16xf32>
    %55 = arith.mulf %50, %54 : vector<2x16x16xf32>
    "tpu.trace_start"() <{level = 10 : i32, message = "bqk,bkd->bqd"}> : () -> ()
    %cst_28 = arith.constant dense<0.000000e+00> : vector<2x16x16xf32>
    %56 = tpu.matmul %55, %44, %cst_28 {dimension_numbers = #tpu.dot_dimension_numbers<[2], [1], [1], [2], [0, 0, 0, 1, 1, 2], [0], [0]>} : vector<2x16x16xf32>, vector<2x16x16xf32>, vector<2x16x16xf32> -> vector<2x16x16xf32>
    "tpu.trace_stop"() : () -> ()
    %57 = vector.shape_cast %56 : vector<2x16x16xf32> to vector<32x16xf32>
    %58 = vector.extract_strided_slice %24 {offsets = [0, 16], sizes = [32, 16], strides = [1, 1]} : vector<32x64xf32> to vector<32x16xf32>
    %59 = vector.shape_cast %58 : vector<32x16xf32> to vector<2x16x16xf32>
    %60 = vector.extract_strided_slice %31 {offsets = [0, 16], sizes = [32, 16], strides = [1, 1]} : vector<32x64xf32> to vector<32x16xf32>
    %61 = vector.shape_cast %60 : vector<32x16xf32> to vector<2x16x16xf32>
    %62 = vector.extract_strided_slice %38 {offsets = [0, 16], sizes = [32, 16], strides = [1, 1]} : vector<32x64xf32> to vector<32x16xf32>
    %63 = vector.shape_cast %62 : vector<32x16xf32> to vector<2x16x16xf32>
    "tpu.trace_start"() <{level = 10 : i32, message = "bqd,bkd->bqk"}> : () -> ()
    %cst_29 = arith.constant dense<0.000000e+00> : vector<2x16x16xf32>
    %64 = tpu.matmul %59, %61, %cst_29 {dimension_numbers = #tpu.dot_dimension_numbers<[2], [2], [1], [1], [0, 0, 0, 1, 1, 1], [0], [0]>} : vector<2x16x16xf32>, vector<2x16x16xf32>, vector<2x16x16xf32> -> vector<2x16x16xf32>
    "tpu.trace_stop"() : () -> ()
    %cst_30 = arith.constant dense<0xFF800000> : vector<2x16xf32>
    %65 = vector.multi_reduction <maximumf>, %64, %cst_30 [2] : vector<2x16x16xf32> to vector<2x16xf32>
    %66 = vector.shape_cast %65 : vector<2x16xf32> to vector<2x16x1xf32>
    %67 = vector.broadcast %66 : vector<2x16x1xf32> to vector<2x16x16xf32>
    %68 = arith.subf %64, %67 : vector<2x16x16xf32>
    %69 = math.exp %68 : vector<2x16x16xf32>
    %cst_31 = arith.constant dense<0.000000e+00> : vector<2x16xf32>
    %70 = vector.multi_reduction <add>, %69, %cst_31 [2] : vector<2x16x16xf32> to vector<2x16xf32>
    %71 = vector.shape_cast %70 : vector<2x16xf32> to vector<2x16x1xf32>
    %72 = tpu.reciprocal %71 {approx = true} : vector<2x16x1xf32> -> vector<2x16x1xf32>
    %73 = vector.broadcast %72 : vector<2x16x1xf32> to vector<2x16x16xf32>
    %74 = arith.mulf %69, %73 : vector<2x16x16xf32>
    "tpu.trace_start"() <{level = 10 : i32, message = "bqk,bkd->bqd"}> : () -> ()
    %cst_32 = arith.constant dense<0.000000e+00> : vector<2x16x16xf32>
    %75 = tpu.matmul %74, %63, %cst_32 {dimension_numbers = #tpu.dot_dimension_numbers<[2], [1], [1], [2], [0, 0, 0, 1, 1, 2], [0], [0]>} : vector<2x16x16xf32>, vector<2x16x16xf32>, vector<2x16x16xf32> -> vector<2x16x16xf32>
    "tpu.trace_stop"() : () -> ()
    %76 = vector.shape_cast %75 : vector<2x16x16xf32> to vector<32x16xf32>
    %77 = vector.extract_strided_slice %24 {offsets = [0, 32], sizes = [32, 16], strides = [1, 1]} : vector<32x64xf32> to vector<32x16xf32>
    %78 = vector.shape_cast %77 : vector<32x16xf32> to vector<2x16x16xf32>
    %79 = vector.extract_strided_slice %31 {offsets = [0, 32], sizes = [32, 16], strides = [1, 1]} : vector<32x64xf32> to vector<32x16xf32>
    %80 = vector.shape_cast %79 : vector<32x16xf32> to vector<2x16x16xf32>
    %81 = vector.extract_strided_slice %38 {offsets = [0, 32], sizes = [32, 16], strides = [1, 1]} : vector<32x64xf32> to vector<32x16xf32>
    %82 = vector.shape_cast %81 : vector<32x16xf32> to vector<2x16x16xf32>
    "tpu.trace_start"() <{level = 10 : i32, message = "bqd,bkd->bqk"}> : () -> ()
    %cst_33 = arith.constant dense<0.000000e+00> : vector<2x16x16xf32>
    %83 = tpu.matmul %78, %80, %cst_33 {dimension_numbers = #tpu.dot_dimension_numbers<[2], [2], [1], [1], [0, 0, 0, 1, 1, 1], [0], [0]>} : vector<2x16x16xf32>, vector<2x16x16xf32>, vector<2x16x16xf32> -> vector<2x16x16xf32>
    "tpu.trace_stop"() : () -> ()
    %cst_34 = arith.constant dense<0xFF800000> : vector<2x16xf32>
    %84 = vector.multi_reduction <maximumf>, %83, %cst_34 [2] : vector<2x16x16xf32> to vector<2x16xf32>
    %85 = vector.shape_cast %84 : vector<2x16xf32> to vector<2x16x1xf32>
    %86 = vector.broadcast %85 : vector<2x16x1xf32> to vector<2x16x16xf32>
    %87 = arith.subf %83, %86 : vector<2x16x16xf32>
    %88 = math.exp %87 : vector<2x16x16xf32>
    %cst_35 = arith.constant dense<0.000000e+00> : vector<2x16xf32>
    %89 = vector.multi_reduction <add>, %88, %cst_35 [2] : vector<2x16x16xf32> to vector<2x16xf32>
    %90 = vector.shape_cast %89 : vector<2x16xf32> to vector<2x16x1xf32>
    %91 = tpu.reciprocal %90 {approx = true} : vector<2x16x1xf32> -> vector<2x16x1xf32>
    %92 = vector.broadcast %91 : vector<2x16x1xf32> to vector<2x16x16xf32>
    %93 = arith.mulf %88, %92 : vector<2x16x16xf32>
    "tpu.trace_start"() <{level = 10 : i32, message = "bqk,bkd->bqd"}> : () -> ()
    %cst_36 = arith.constant dense<0.000000e+00> : vector<2x16x16xf32>
    %94 = tpu.matmul %93, %82, %cst_36 {dimension_numbers = #tpu.dot_dimension_numbers<[2], [1], [1], [2], [0, 0, 0, 1, 1, 2], [0], [0]>} : vector<2x16x16xf32>, vector<2x16x16xf32>, vector<2x16x16xf32> -> vector<2x16x16xf32>
    "tpu.trace_stop"() : () -> ()
    %95 = vector.shape_cast %94 : vector<2x16x16xf32> to vector<32x16xf32>
    %96 = vector.extract_strided_slice %24 {offsets = [0, 48], sizes = [32, 16], strides = [1, 1]} : vector<32x64xf32> to vector<32x16xf32>
    %97 = vector.shape_cast %96 : vector<32x16xf32> to vector<2x16x16xf32>
    %98 = vector.extract_strided_slice %31 {offsets = [0, 48], sizes = [32, 16], strides = [1, 1]} : vector<32x64xf32> to vector<32x16xf32>
    %99 = vector.shape_cast %98 : vector<32x16xf32> to vector<2x16x16xf32>
    %100 = vector.extract_strided_slice %38 {offsets = [0, 48], sizes = [32, 16], strides = [1, 1]} : vector<32x64xf32> to vector<32x16xf32>
    %101 = vector.shape_cast %100 : vector<32x16xf32> to vector<2x16x16xf32>
    "tpu.trace_start"() <{level = 10 : i32, message = "bqd,bkd->bqk"}> : () -> ()
    %cst_37 = arith.constant dense<0.000000e+00> : vector<2x16x16xf32>
    %102 = tpu.matmul %97, %99, %cst_37 {dimension_numbers = #tpu.dot_dimension_numbers<[2], [2], [1], [1], [0, 0, 0, 1, 1, 1], [0], [0]>} : vector<2x16x16xf32>, vector<2x16x16xf32>, vector<2x16x16xf32> -> vector<2x16x16xf32>
    "tpu.trace_stop"() : () -> ()
    %cst_38 = arith.constant dense<0xFF800000> : vector<2x16xf32>
    %103 = vector.multi_reduction <maximumf>, %102, %cst_38 [2] : vector<2x16x16xf32> to vector<2x16xf32>
    %104 = vector.shape_cast %103 : vector<2x16xf32> to vector<2x16x1xf32>
    %105 = vector.broadcast %104 : vector<2x16x1xf32> to vector<2x16x16xf32>
    %106 = arith.subf %102, %105 : vector<2x16x16xf32>
    %107 = math.exp %106 : vector<2x16x16xf32>
    %cst_39 = arith.constant dense<0.000000e+00> : vector<2x16xf32>
    %108 = vector.multi_reduction <add>, %107, %cst_39 [2] : vector<2x16x16xf32> to vector<2x16xf32>
    %109 = vector.shape_cast %108 : vector<2x16xf32> to vector<2x16x1xf32>
    %110 = tpu.reciprocal %109 {approx = true} : vector<2x16x1xf32> -> vector<2x16x1xf32>
    %111 = vector.broadcast %110 : vector<2x16x1xf32> to vector<2x16x16xf32>
    %112 = arith.mulf %107, %111 : vector<2x16x16xf32>
    "tpu.trace_start"() <{level = 10 : i32, message = "bqk,bkd->bqd"}> : () -> ()
    %cst_40 = arith.constant dense<0.000000e+00> : vector<2x16x16xf32>
    %113 = tpu.matmul %112, %101, %cst_40 {dimension_numbers = #tpu.dot_dimension_numbers<[2], [1], [1], [2], [0, 0, 0, 1, 1, 2], [0], [0]>} : vector<2x16x16xf32>, vector<2x16x16xf32>, vector<2x16x16xf32> -> vector<2x16x16xf32>
    "tpu.trace_stop"() : () -> ()
    %114 = vector.shape_cast %113 : vector<2x16x16xf32> to vector<32x16xf32>
    %115 = tpu.concatenate %57, %76, %95, %114 in 1 : vector<32x16xf32>, vector<32x16xf32>, vector<32x16xf32>, vector<32x16xf32> -> vector<32x64xf32>
    %c0_41 = arith.constant 0 : index
    %c0_42 = arith.constant 0 : index
    %116 = vector.load %arg4[%c0_41, %c0_42] : memref<64x64xf32, #tpu.memory_space<vmem>>, vector<64x64xf32>
    %cst_43 = arith.constant dense<0.000000e+00> : vector<32x64xf32>
    %117 = tpu.matmul %115, %116, %cst_43 {dimension_numbers = #tpu.dot_dimension_numbers<[1], [0], [0], [1], [0, 0, 1, 1], [], []>} : vector<32x64xf32>, vector<64x64xf32>, vector<32x64xf32> -> vector<32x64xf32>
    %c0_44 = arith.constant 0 : index
    %c0_45 = arith.constant 0 : index
    %118 = vector.load %arg5[%c0_44, %c0_45] : memref<1x64xf32, #tpu.memory_space<vmem>>, vector<1x64xf32>
    %119 = vector.broadcast %118 : vector<1x64xf32> to vector<32x64xf32>
    %120 = arith.addf %117, %119 : vector<32x64xf32>
    %121 = vector.shape_cast %120 : vector<32x64xf32> to vector<2x16x64xf32>
    %c0_46 = arith.constant 0 : index
    %c0_47 = arith.constant 0 : index
    %c0_48 = arith.constant 0 : index
    %122 = vector.load %arg6[%c0_46, %c0_47, %c0_48] : memref<2x16x64xf32, #tpu.memory_space<vmem>>, vector<2x16x64xf32>
    tpu.vector_store %arg6[%c0_46, %c0_47, %c0_48], %121 {strides = array<i32>} : memref<2x16x64xf32, #tpu.memory_space<vmem>>, vector<2x16x64xf32>,
    return
  }
  func.func @transform_0(%arg0: i32) -> (i32, i32, i32) {
    %c0_i32 = arith.constant 0 : i32
    %c0_i32_0 = arith.constant 0 : i32
    %c0_i32_1 = arith.constant 0 : i32
    return %arg0, %c0_i32, %c0_i32_0 : i32, i32, i32
  }
  func.func @transform_1(%arg0: i32) -> (i32, i32, i32) {
    %c0_i32 = arith.constant 0 : i32
    %c0_i32_0 = arith.constant 0 : i32
    %c0_i32_1 = arith.constant 0 : i32
    %c0_i32_2 = arith.constant 0 : i32
    return %c0_i32, %c0_i32_0, %c0_i32_1 : i32, i32, i32
  }
  func.func @transform_2(%arg0: i32) -> (i32, i32, i32) {
    %c0_i32 = arith.constant 0 : i32
    %c0_i32_0 = arith.constant 0 : i32
    %c0_i32_1 = arith.constant 0 : i32
    %c0_i32_2 = arith.constant 0 : i32
    return %c0_i32, %c0_i32_0, %c0_i32_1 : i32, i32, i32
  }
  func.func @transform_3(%arg0: i32) -> (i32, i32) {
    %c0_i32 = arith.constant 0 : i32
    %c0_i32_0 = arith.constant 0 : i32
    %c0_i32_1 = arith.constant 0 : i32
    return %c0_i32, %c0_i32_0 : i32, i32
  }
  func.func @transform_4(%arg0: i32) -> (i32, i32) {
    %c0_i32 = arith.constant 0 : i32
    %c0_i32_0 = arith.constant 0 : i32
    %c0_i32_1 = arith.constant 0 : i32
    return %c0_i32, %c0_i32_0 : i32, i32
  }
  func.func @transform_5(%arg0: i32) -> (i32, i32, i32) {
    %c0_i32 = arith.constant 0 : i32
    %c0_i32_0 = arith.constant 0 : i32
    %c0_i32_1 = arith.constant 0 : i32
    return %arg0, %c0_i32, %c0_i32_0 : i32, i32, i32
  }
}

</mosaic_0001>

<llo_original>
// kernel: tpu_custom_call.1
$region0: #{tpu_custom_call.1}
  #allocation0 [shape = 'u32[]', space=smem, size = 0x4, offset = 0x4, fixed_abs, tag = 'smem constant byte address 0x4 - core index']
  #allocation1 [shape = 'u32[144,128]{1,0:T(1,128)}', space=vmem, size = 0x12000, scoped, tag = 'internal scratch']
  %s0 = inlined_call_operand.hbm [shape: f32[2,16,64], index: 0, kind: input, shape index: {}]
  %s1 = inlined_call_operand.hbm [shape: f32[3,64,64], index: 1, kind: input, shape index: {}]
  %s2 = inlined_call_operand.vmem [shape: f32[3,1,64], index: 2, kind: input, shape index: {}]
  %s3 = inlined_call_operand.hbm [shape: f32[64,64], index: 3, kind: input, shape index: {}]
  %s4 = inlined_call_operand.vmem [shape: f32[1,64], index: 4, kind: input, shape index: {}]
  %s5 = inlined_call_operand.hbm [shape: f32[2,16,64], index: 5, kind: output, shape index: {}]
  %s6 = sld [smem:[#allocation0]]
  $region42: #{tpu_custom_call.1} parent=0
    _
  %s8 = ssub.s32 1, %s6
  %s9 = scalar_select 0, %s8, %s6
  $region1: #{tpu_custom_call.1} parent=0
    #allocation2 [shape = 'u8[16384]{0}', space=vmem, size = 0x4000, scoped, tag = 'input window, operand 0, single buffered']
    #allocation3 [shape = 's32[1]{0}', space=sflag, size = 0x4, scoped, tag = 'scoped memory for tpu_custom_call.1']
    #allocation4 [shape = 's32[1]{0}', space=sflag, size = 0x4, scoped, tag = 'scoped memory for tpu_custom_call.1']
    #allocation5 [shape = 'u8[98304]{0}', space=vmem, size = 0x18000, scoped, tag = 'input window, operand 1, single buffered']
    #allocation6 [shape = 's32[1]{0}', space=sflag, size = 0x4, scoped, tag = 'scoped memory for tpu_custom_call.1']
    #allocation7 [shape = 'u8[32768]{0}', space=vmem, size = 0x8000, scoped, tag = 'input window, operand 3, single buffered']
    #allocation8 [shape = 'u8[16384]{0}', space=vmem, size = 0x4000, scoped, tag = 'output window, operand 0, single buffered']
    %10 = vsyncpa [#allocation3], 0
    %11 = vsyncpa [#allocation6], 0
    %12 = vsyncpa [#allocation4], 0
    // Predicated region
    $region2: #{tpu_custom_call.1} parent=1 // pred_check
      _
    $region3: #{tpu_custom_call.1} parent=1 // pred_check_branch
      %14 = sbr.rel (0) target = $region5
    $region4: #{tpu_custom_call.1} parent=1 // pred_region
      %s16 = ssub.s32 512, 512
      %17 = vsyncadd [#allocation3], %s16
      %s18 = sshll.u32 [#allocation2], 4
      %s19 = int_to_ptr.vmem [resolvable:$true] %s18
      %24 = dma.hbm_to_vmem [thread:$0]  %s0, 512, %s19, [#allocation3], 128, 128, 8
    $region5: #{tpu_custom_call.1} parent=1 // pred_fallthru
      _
    // Predicated region
    $region6: #{tpu_custom_call.1} parent=1 // pred_check
      _
    $region7: #{tpu_custom_call.1} parent=1 // pred_check_branch
      %26 = sbr.rel (0) target = $region9
    $region8: #{tpu_custom_call.1} parent=1 // pred_region
      %s28 = ssub.s32 3072, 3072
      %29 = vsyncadd [#allocation6], %s28
      %s30 = sshll.u32 [#allocation5], 4
      %s31 = int_to_ptr.vmem [resolvable:$true] %s30
      %36 = dma.hbm_to_vmem [thread:$0]  %s1, 3072, %s31, [#allocation6], 128, 128, 8
    $region9: #{tpu_custom_call.1} parent=1 // pred_fallthru
      _
    // Predicated region
    $region10: #{tpu_custom_call.1} parent=1 // pred_check
      _
    $region11: #{tpu_custom_call.1} parent=1 // pred_check_branch
      %38 = sbr.rel (0) target = $region13
    $region12: #{tpu_custom_call.1} parent=1 // pred_region
      _
    $region13: #{tpu_custom_call.1} parent=1 // pred_fallthru
      _
    // Predicated region
    $region14: #{tpu_custom_call.1} parent=1 // pred_check
      _
    $region15: #{tpu_custom_call.1} parent=1 // pred_check_branch
      %40 = sbr.rel (0) target = $region17
    $region16: #{tpu_custom_call.1} parent=1 // pred_region
      %s42 = ssub.s32 1024, 1024
      %43 = vsyncadd [#allocation6], %s42
      %s44 = sshll.u32 [#allocation7], 4
      %s45 = int_to_ptr.vmem [resolvable:$true] %s44
      %50 = dma.hbm_to_vmem [thread:$0]  %s3, 1024, %s45, [#allocation6], 128, 128, 8
    $region17: #{tpu_custom_call.1} parent=1 // pred_fallthru
      _
    // Predicated region
    $region18: #{tpu_custom_call.1} parent=1 // pred_check
      _
    $region19: #{tpu_custom_call.1} parent=1 // pred_check_branch
      %52 = sbr.rel (0) target = $region21
    $region20: #{tpu_custom_call.1} parent=1 // pred_region
      _
    $region21: #{tpu_custom_call.1} parent=1 // pred_fallthru
      _
    // Predicated region
    $region22: #{tpu_custom_call.1} parent=1 // pred_check
      _
    $region23: #{tpu_custom_call.1} parent=1 // pred_check_branch
      %54 = sbr.rel (0) target = $region25
    $region24: #{tpu_custom_call.1} parent=1 // pred_region
      %55 = dma.done [#allocation3], 512
    $region25: #{tpu_custom_call.1} parent=1 // pred_fallthru
      _
    // Predicated region
    $region26: #{tpu_custom_call.1} parent=1 // pred_check
      _
    $region27: #{tpu_custom_call.1} parent=1 // pred_check_branch
      %57 = sbr.rel (0) target = $region29
    $region28: #{tpu_custom_call.1} parent=1 // pred_region
      %58 = dma.done [#allocation6], 3072
    $region29: #{tpu_custom_call.1} parent=1 // pred_fallthru
      _
    // Predicated region
    $region30: #{tpu_custom_call.1} parent=1 // pred_check
      _
    $region31: #{tpu_custom_call.1} parent=1 // pred_check_branch
      %60 = sbr.rel (0) target = $region33
    $region32: #{tpu_custom_call.1} parent=1 // pred_region
      %61 = dma.done [#allocation6], 1024
    $region33: #{tpu_custom_call.1} parent=1 // pred_fallthru
      _
    %v62 = vld [vmem:[#allocation2] sm:$0xff]
    %v63 = vld [vmem:[#allocation2 + $0x8] sm:$0xff]
    %v64 = vld [vmem:[#allocation2 + $0x10] sm:$0xff]
    %v65 = vld [vmem:[#allocation2 + $0x18] sm:$0xff]
    %vm66 = vcmask 523264
    %v67 = vsel %vm66, %v62, 0.0
    %68 = vadd.xlane.f32.xlu0 %v67
    %v69 = vpop.xlane.xlu0 %68
    %v70 = vsel %vm66, %v63, 0.0
    %71 = vadd.xlane.f32.xlu0 %v70
    %v72 = vpop.xlane.xlu0 %71
    %v73 = vsel %vm66, %v64, 0.0
    %74 = vadd.xlane.f32.xlu0 %v73
    %v75 = vpop.xlane.xlu0 %74
    %v76 = vsel %vm66, %v65, 0.0
    %77 = vadd.xlane.f32.xlu0 %v76
    %v78 = vpop.xlane.xlu0 %77
    %v79 = vrcp.pop 64.0
    %v80 = vmul.f32 %v69, %v79
    %v81 = vmul.f32 %v72, %v79
    %v82 = vmul.f32 %v75, %v79
    %v83 = vmul.f32 %v78, %v79
    %v84 = vsub.f32 %v62, %v80
    %v85 = vsub.f32 %v63, %v81
    %v86 = vsub.f32 %v64, %v82
    %v87 = vsub.f32 %v65, %v83
    %v88 = vmul.f32 %v84, %v84
    %v89 = vmul.f32 %v85, %v85
    %v90 = vmul.f32 %v86, %v86
    %v91 = vmul.f32 %v87, %v87
    %v92 = vsel %vm66, %v88, 0.0
    %93 = vadd.xlane.f32.xlu0 %v92
    %v94 = vpop.xlane.xlu0 %93
    %v95 = vsel %vm66, %v89, 0.0
    %96 = vadd.xlane.f32.xlu0 %v95
    %v97 = vpop.xlane.xlu0 %96
    %v98 = vsel %vm66, %v90, 0.0
    %99 = vadd.xlane.f32.xlu0 %v98
    %v100 = vpop.xlane.xlu0 %99
    %v101 = vsel %vm66, %v91, 0.0
    %102 = vadd.xlane.f32.xlu0 %v101
    %v103 = vpop.xlane.xlu0 %102
    %v104 = vmul.f32 %v94, %v79
    %v105 = vmul.f32 %v97, %v79
    %v106 = vmul.f32 %v100, %v79
    %v107 = vmul.f32 %v103, %v79
    %v108 = vadd.f32 %v104, 1e-05
    %v109 = vadd.f32 %v105, 1e-05
    %v110 = vadd.f32 %v106, 1e-05
    %v111 = vadd.f32 %v107, 1e-05
    %v112 = vrsqrt.pop %v108
    %v113 = vrsqrt.pop %v109
    %v114 = vrsqrt.pop %v110
    %v115 = vrsqrt.pop %v111
    %v116 = vmul.f32 %v84, %v112
    %v117 = vmul.f32 %v85, %v113
    %v118 = vmul.f32 %v86, %v114
    %v119 = vmul.f32 %v87, %v115
    %v120 = vld [vmem:[#allocation5] sm:$0xff]
    %v121 = vld [vmem:[#allocation5 + $0x8] sm:$0xff]
    %v122 = vld [vmem:[#allocation5 + $0x10] sm:$0xff]
    %v123 = vld [vmem:[#allocation5 + $0x18] sm:$0xff]
    %v124 = vld [vmem:[#allocation5 + $0x20] sm:$0xff]
    %v125 = vld [vmem:[#allocation5 + $0x28] sm:$0xff]
    %v126 = vld [vmem:[#allocation5 + $0x30] sm:$0xff]
    %v127 = vld [vmem:[#allocation5 + $0x38] sm:$0xff]
    %v128 = vld [vmem:[%s2] sm:$0x1]
    %v130 = vlaneseq
    %v131 = vshrl.u32 %v130, 7
    %v132 = vsub.s32 0, %v131
    %v133 = vrot.slane %v128, %v132
    %v136 = vsel %vm66, %v116, 0
    %v139 = vsel %vm66, %v117, 0
    %v142 = vsel %vm66, %v118, 0
    %v145 = vsel %vm66, %v119, 0
    %147 = vmatprep.subr.mxu0 0.0
    %148 = vmatpush1.msra.mxu0 %v120
    %149 = vmatprep.subr.mxu0 0.0
    %150 = vmatpush1.msra.mxu0 %v121
    %151 = vmatprep.subr.mxu0 0.0
    %152 = vmatpush1.msra.mxu0 %v122
    %153 = vmatprep.subr.mxu0 0.0
    %154 = vmatpush1.msra.mxu0 %v123
    %155 = vmatprep.subr.mxu0 0.0
    %156 = vmatpush1.msra.mxu0 %v124
    %157 = vmatprep.subr.mxu0 0.0
    %158 = vmatpush1.msra.mxu0 %v125
    %159 = vmatprep.subr.mxu0 0.0
    %160 = vmatpush1.msra.mxu0 %v126
    %161 = vmatprep.subr.mxu0 0.0
    %162 = vmatpush1.msra.mxu0 %v127
    %163 = vmatprep.subr.mxu0 0.0
    %164 = vmatpush1.msra.mxu0 0.0
    %165 = vmatprep.subr.mxu0 0.0
    %166 = vmatpush1.msra.mxu0 0.0
    %167 = vmatprep.subr.mxu0 0.0
    %168 = vmatpush1.msra.mxu0 0.0
    %169 = vmatprep.subr.mxu0 0.0
    %170 = vmatpush1.msra.mxu0 0.0
    %171 = vmatprep.subr.mxu0 0.0
    %172 = vmatpush1.msra.mxu0 0.0
    %173 = vmatprep.subr.mxu0 0.0
    %174 = vmatpush1.msra.mxu0 0.0
    %175 = vmatprep.subr.mxu0 0.0
    %176 = vmatpush1.msra.mxu0 0.0
    %177 = vmatprep.subr.mxu0 0.0
    %178 = vmatpush1.msra.mxu0 0.0
    %179 = vmatprep.subr.mxu0 0.0
    %180 = vmatpush1.msra.mxu0 0.0
    %181 = vmatprep.subr.mxu0 0.0
    %182 = vmatpush1.msra.mxu0 0.0
    %183 = vmatprep.subr.mxu0 0.0
    %184 = vmatpush1.msra.mxu0 0.0
    %185 = vmatprep.subr.mxu0 0.0
    %186 = vmatpush1.msra.mxu0 0.0
    %187 = vmatprep.subr.mxu0 0.0
    %188 = vmatpush1.msra.mxu0 0.0
    %189 = vmatprep.subr.mxu0 0.0
    %190 = vmatpush1.msra.mxu0 0.0
    %191 = vmatprep.subr.mxu0 0.0
    %192 = vmatpush1.msra.mxu0 0.0
    %193 = vmatprep.subr.mxu0 0.0
    %194 = vmatpush1.msra.mxu0 0.0
    %195 = vmatprep.subr.mxu0 0.0
    %196 = vmatpush1.msra.mxu0 0.0
    %197 = vmatprep.subr.mxu0 0.0
    %198 = vmatpush1.msra.mxu0 0.0
    %199 = vmatprep.subr.mxu0 0.0
    %200 = vmatpush1.msra.mxu0 0.0
    %201 = vmatprep.subr.mxu0 0.0
    %202 = vmatpush1.msra.mxu0 0.0
    %203 = vmatprep.subr.mxu0 0.0
    %204 = vmatpush1.msra.mxu0 0.0
    %205 = vmatprep.subr.mxu0 0.0
    %206 = vmatpush1.msra.mxu0 0.0
    %207 = vmatprep.subr.mxu0 0.0
    %208 = vmatpush1.msra.mxu0 0.0
    %209 = vmatprep.subr.mxu0 0.0
    %210 = vmatpush1.msra.mxu0 0.0
    %211 = vmatprep.mubr.f32.mxu0 0.0
    %212 = vmatmul.mubr.f32.gmra.mrb[0].mxu0 %v136
    %v213 = vpop.f32.mrb[0].mxu0
    %v214 = vadd.f32 %v133, %v213
    %v215 = vpop.f32.mrb[0].mxu0
    %216 = vmatprep.mubr.f32.mxu0 0.0
    %217 = vmatmul.mubr.f32.gmra.mrb[0].mxu0 %v139
    %v218 = vpop.f32.mrb[0].mxu0
    %v219 = vadd.f32 %v133, %v218
    %v220 = vpop.f32.mrb[0].mxu0
    %221 = vmatprep.mubr.f32.mxu0 0.0
    %222 = vmatmul.mubr.f32.gmra.mrb[0].mxu0 %v142
    %v223 = vpop.f32.mrb[0].mxu0
    %v224 = vadd.f32 %v133, %v223
    %v225 = vpop.f32.mrb[0].mxu0
    %226 = vmatprep.mubr.f32.mxu0 0.0
    %227 = vmatmul.mubr.f32.gmra.mrb[0].mxu0 %v145
    %v228 = vpop.f32.mrb[0].mxu0
    %v229 = vadd.f32 %v133, %v228
    %v230 = vpop.f32.mrb[0].mxu0
    %231 = vdwg.mxu0
    %s232 = scalar_lea.vmem [#allocation5], 64
    %v233 = vld [vmem:[%s232] sm:$0xff]
    %v234 = vld [vmem:[%s232 + $0x8] sm:$0xff]
    %v235 = vld [vmem:[%s232 + $0x10] sm:$0xff]
    %v236 = vld [vmem:[%s232 + $0x18] sm:$0xff]
    %v237 = vld [vmem:[%s232 + $0x20] sm:$0xff]
    %v238 = vld [vmem:[%s232 + $0x28] sm:$0xff]
    %v239 = vld [vmem:[%s232 + $0x30] sm:$0xff]
    %v240 = vld [vmem:[%s232 + $0x38] sm:$0xff]
    %s241 = scalar_lea.vmem %s2, 1
    %v242 = vld [vmem:[%s241] sm:$0x1]
    %v244 = vlaneseq
    %v245 = vshrl.u32 %v244, 7
    %v246 = vsub.s32 0, %v245
    %v247 = vrot.slane %v242, %v246
    %249 = vmatprep.subr.mxu0 0.0
    %250 = vmatpush1.msra.mxu0 %v233
    %251 = vmatprep.subr.mxu0 0.0
    %252 = vmatpush1.msra.mxu0 %v234
    %253 = vmatprep.subr.mxu0 0.0
    %254 = vmatpush1.msra.mxu0 %v235
    %255 = vmatprep.subr.mxu0 0.0
    %256 = vmatpush1.msra.mxu0 %v236
    %257 = vmatprep.subr.mxu0 0.0
    %258 = vmatpush1.msra.mxu0 %v237
    %259 = vmatprep.subr.mxu0 0.0
    %260 = vmatpush1.msra.mxu0 %v238
    %261 = vmatprep.subr.mxu0 0.0
    %262 = vmatpush1.msra.mxu0 %v239
    %263 = vmatprep.subr.mxu0 0.0
    %264 = vmatpush1.msra.mxu0 %v240
    %265 = vmatprep.subr.mxu0 0.0
    %266 = vmatpush1.msra.mxu0 0.0
    %267 = vmatprep.subr.mxu0 0.0
    %268 = vmatpush1.msra.mxu0 0.0
    %269 = vmatprep.subr.mxu0 0.0
    %270 = vmatpush1.msra.mxu0 0.0
    %271 = vmatprep.subr.mxu0 0.0
    %272 = vmatpush1.msra.mxu0 0.0
    %273 = vmatprep.subr.mxu0 0.0
    %274 = vmatpush1.msra.mxu0 0.0
    %275 = vmatprep.subr.mxu0 0.0
    %276 = vmatpush1.msra.mxu0 0.0
    %277 = vmatprep.subr.mxu0 0.0
    %278 = vmatpush1.msra.mxu0 0.0
    %279 = vmatprep.subr.mxu0 0.0
    %280 = vmatpush1.msra.mxu0 0.0
    %281 = vmatprep.subr.mxu0 0.0
    %282 = vmatpush1.msra.mxu0 0.0
    %283 = vmatprep.subr.mxu0 0.0
    %284 = vmatpush1.msra.mxu0 0.0
    %285 = vmatprep.subr.mxu0 0.0
    %286 = vmatpush1.msra.mxu0 0.0
    %287 = vmatprep.subr.mxu0 0.0
    %288 = vmatpush1.msra.mxu0 0.0
    %289 = vmatprep.subr.mxu0 0.0
    %290 = vmatpush1.msra.mxu0 0.0
    %291 = vmatprep.subr.mxu0 0.0
    %292 = vmatpush1.msra.mxu0 0.0
    %293 = vmatprep.subr.mxu0 0.0
    %294 = vmatpush1.msra.mxu0 0.0
    %295 = vmatprep.subr.mxu0 0.0
    %296 = vmatpush1.msra.mxu0 0.0
    %297 = vmatprep.subr.mxu0 0.0
    %298 = vmatpush1.msra.mxu0 0.0
    %299 = vmatprep.subr.mxu0 0.0
    %300 = vmatpush1.msra.mxu0 0.0
    %301 = vmatprep.subr.mxu0 0.0
    %302 = vmatpush1.msra.mxu0 0.0
    %303 = vmatprep.subr.mxu0 0.0
    %304 = vmatpush1.msra.mxu0 0.0
    %305 = vmatprep.subr.mxu0 0.0
    %306 = vmatpush1.msra.mxu0 0.0
    %307 = vmatprep.subr.mxu0 0.0
    %308 = vmatpush1.msra.mxu0 0.0
    %309 = vmatprep.subr.mxu0 0.0
    %310 = vmatpush1.msra.mxu0 0.0
    %311 = vmatprep.subr.mxu0 0.0
    %312 = vmatpush1.msra.mxu0 0.0
    %313 = vmatprep.mubr.f32.mxu0 0.0
    %314 = vmatmul.mubr.f32.gmra.mrb[0].mxu0 %v136
    %v315 = vpop.f32.mrb[0].mxu0
    %v316 = vadd.f32 %v247, %v315
    %v317 = vpop.f32.mrb[0].mxu0
    %318 = vmatprep.mubr.f32.mxu0 0.0
    %319 = vmatmul.mubr.f32.gmra.mrb[0].mxu0 %v139
    %v320 = vpop.f32.mrb[0].mxu0
    %v321 = vadd.f32 %v247, %v320
    %v322 = vpop.f32.mrb[0].mxu0
    %323 = vmatprep.mubr.f32.mxu0 0.0
    %324 = vmatmul.mubr.f32.gmra.mrb[0].mxu0 %v142
    %v325 = vpop.f32.mrb[0].mxu0
    %v326 = vadd.f32 %v247, %v325
    %v327 = vpop.f32.mrb[0].mxu0
    %328 = vmatprep.mubr.f32.mxu0 0.0
    %329 = vmatmul.mubr.f32.gmra.mrb[0].mxu0 %v145
    %v330 = vpop.f32.mrb[0].mxu0
    %v331 = vadd.f32 %v247, %v330
    %v332 = vpop.f32.mrb[0].mxu0
    %333 = vdwg.mxu0
    %s334 = scalar_lea.vmem [#allocation5], 128
    %v335 = vld [vmem:[%s334] sm:$0xff]
    %v336 = vld [vmem:[%s334 + $0x8] sm:$0xff]
    %v337 = vld [vmem:[%s334 + $0x10] sm:$0xff]
    %v338 = vld [vmem:[%s334 + $0x18] sm:$0xff]
    %v339 = vld [vmem:[%s334 + $0x20] sm:$0xff]
    %v340 = vld [vmem:[%s334 + $0x28] sm:$0xff]
    %v341 = vld [vmem:[%s334 + $0x30] sm:$0xff]
    %v342 = vld [vmem:[%s334 + $0x38] sm:$0xff]
    %s343 = scalar_lea.vmem %s2, 2
    %v344 = vld [vmem:[%s343] sm:$0x1]
    %v346 = vlaneseq
    %v347 = vshrl.u32 %v346, 7
    %v348 = vsub.s32 0, %v347
    %v349 = vrot.slane %v344, %v348
    %351 = vmatprep.subr.mxu0 0.0
    %352 = vmatpush1.msra.mxu0 %v335
    %353 = vmatprep.subr.mxu0 0.0
    %354 = vmatpush1.msra.mxu0 %v336
    %355 = vmatprep.subr.mxu0 0.0
    %356 = vmatpush1.msra.mxu0 %v337
    %357 = vmatprep.subr.mxu0 0.0
    %358 = vmatpush1.msra.mxu0 %v338
    %359 = vmatprep.subr.mxu0 0.0
    %360 = vmatpush1.msra.mxu0 %v339
    %361 = vmatprep.subr.mxu0 0.0
    %362 = vmatpush1.msra.mxu0 %v340
    %363 = vmatprep.subr.mxu0 0.0
    %364 = vmatpush1.msra.mxu0 %v341
    %365 = vmatprep.subr.mxu0 0.0
    %366 = vmatpush1.msra.mxu0 %v342
    %367 = vmatprep.subr.mxu0 0.0
    %368 = vmatpush1.msra.mxu0 0.0
    %369 = vmatprep.subr.mxu0 0.0
    %370 = vmatpush1.msra.mxu0 0.0
    %371 = vmatprep.subr.mxu0 0.0
    %372 = vmatpush1.msra.mxu0 0.0
    %373 = vmatprep.subr.mxu0 0.0
    %374 = vmatpush1.msra.mxu0 0.0
    %375 = vmatprep.subr.mxu0 0.0
    %376 = vmatpush1.msra.mxu0 0.0
    %377 = vmatprep.subr.mxu0 0.0
    %378 = vmatpush1.msra.mxu0 0.0
    %379 = vmatprep.subr.mxu0 0.0
    %380 = vmatpush1.msra.mxu0 0.0
    %381 = vmatprep.subr.mxu0 0.0
    %382 = vmatpush1.msra.mxu0 0.0
    %383 = vmatprep.subr.mxu0 0.0
    %384 = vmatpush1.msra.mxu0 0.0
    %385 = vmatprep.subr.mxu0 0.0
    %386 = vmatpush1.msra.mxu0 0.0
    %387 = vmatprep.subr.mxu0 0.0
    %388 = vmatpush1.msra.mxu0 0.0
    %389 = vmatprep.subr.mxu0 0.0
    %390 = vmatpush1.msra.mxu0 0.0
    %391 = vmatprep.subr.mxu0 0.0
    %392 = vmatpush1.msra.mxu0 0.0
    %393 = vmatprep.subr.mxu0 0.0
    %394 = vmatpush1.msra.mxu0 0.0
    %395 = vmatprep.subr.mxu0 0.0
    %396 = vmatpush1.msra.mxu0 0.0
    %397 = vmatprep.subr.mxu0 0.0
    %398 = vmatpush1.msra.mxu0 0.0
    %399 = vmatprep.subr.mxu0 0.0
    %400 = vmatpush1.msra.mxu0 0.0
    %401 = vmatprep.subr.mxu0 0.0
    %402 = vmatpush1.msra.mxu0 0.0
    %403 = vmatprep.subr.mxu0 0.0
    %404 = vmatpush1.msra.mxu0 0.0
    %405 = vmatprep.subr.mxu0 0.0
    %406 = vmatpush1.msra.mxu0 0.0
    %407 = vmatprep.subr.mxu0 0.0
    %408 = vmatpush1.msra.mxu0 0.0
    %409 = vmatprep.subr.mxu0 0.0
    %410 = vmatpush1.msra.mxu0 0.0
    %411 = vmatprep.subr.mxu0 0.0
    %412 = vmatpush1.msra.mxu0 0.0
    %413 = vmatprep.subr.mxu0 0.0
    %414 = vmatpush1.msra.mxu0 0.0
    %415 = vmatprep.mubr.f32.mxu0 0.0
    %416 = vmatmul.mubr.f32.gmra.mrb[0].mxu0 %v136
    %v417 = vpop.f32.mrb[0].mxu0
    %v418 = vadd.f32 %v349, %v417
    %v419 = vpop.f32.mrb[0].mxu0
    %420 = vmatprep.mubr.f32.mxu0 0.0
    %421 = vmatmul.mubr.f32.gmra.mrb[0].mxu0 %v139
    %v422 = vpop.f32.mrb[0].mxu0
    %v423 = vadd.f32 %v349, %v422
    %v424 = vpop.f32.mrb[0].mxu0
    %425 = vmatprep.mubr.f32.mxu0 0.0
    %426 = vmatmul.mubr.f32.gmra.mrb[0].mxu0 %v142
    %v427 = vpop.f32.mrb[0].mxu0
    %v428 = vadd.f32 %v349, %v427
    %v429 = vpop.f32.mrb[0].mxu0
    %430 = vmatprep.mubr.f32.mxu0 0.0
    %431 = vmatmul.mubr.f32.gmra.mrb[0].mxu0 %v145
    %v432 = vpop.f32.mrb[0].mxu0
    %v433 = vadd.f32 %v349, %v432
    %v434 = vpop.f32.mrb[0].mxu0
    %435 = vdwg.mxu0
    %vm436 = vcmask 130048
    %v438 = vsel %vm436, %v214, 0
    %v441 = vsel %vm436, %v219, 0
    %v444 = vsel %vm436, %v316, 0
    %v447 = vsel %vm436, %v321, 0
    %449 = vmatprep.subr.mxu0 0.0
    %450 = vmatpush1.xpose.msra.mxu0 %v444
    %451 = vmatprep.subr.mxu0 0.0
    %452 = vmatpush1.xpose.msra.mxu0 %v447
    %453 = vmatprep.subr.mxu0 0.0
    %454 = vmatpush1.xpose.msra.mxu0 0.0
    %455 = vmatprep.subr.mxu0 0.0
    %456 = vmatpush1.xpose.msra.mxu0 0.0
    %457 = vmatprep.subr.mxu0 0.0
    %458 = vmatpush1.xpose.msra.mxu0 0.0
    %459 = vmatprep.subr.mxu0 0.0
    %460 = vmatpush1.xpose.msra.mxu0 0.0
    %461 = vmatprep.subr.mxu0 0.0
    %462 = vmatpush1.xpose.msra.mxu0 0.0
    %463 = vmatprep.subr.mxu0 0.0
    %464 = vmatpush1.xpose.msra.mxu0 0.0
    %465 = vmatprep.subr.mxu0 0.0
    %466 = vmatpush1.xpose.msra.mxu0 0.0
    %467 = vmatprep.subr.mxu0 0.0
    %468 = vmatpush1.xpose.msra.mxu0 0.0
    %469 = vmatprep.subr.mxu0 0.0
    %470 = vmatpush1.xpose.msra.mxu0 0.0
    %471 = vmatprep.subr.mxu0 0.0
    %472 = vmatpush1.xpose.msra.mxu0 0.0
    %473 = vmatprep.subr.mxu0 0.0
    %474 = vmatpush1.xpose.msra.mxu0 0.0
    %475 = vmatprep.subr.mxu0 0.0
    %476 = vmatpush1.xpose.msra.mxu0 0.0
    %477 = vmatprep.subr.mxu0 0.0
    %478 = vmatpush1.xpose.msra.mxu0 0.0
    %479 = vmatprep.subr.mxu0 0.0
    %480 = vmatpush1.xpose.msra.mxu0 0.0
    %481 = vmatprep.subr.mxu0 0.0
    %482 = vmatpush1.xpose.msra.mxu0 0.0
    %483 = vmatprep.subr.mxu0 0.0
    %484 = vmatpush1.xpose.msra.mxu0 0.0
    %485 = vmatprep.subr.mxu0 0.0
    %486 = vmatpush1.xpose.msra.mxu0 0.0
    %487 = vmatprep.subr.mxu0 0.0
    %488 = vmatpush1.xpose.msra.mxu0 0.0
    %489 = vmatprep.subr.mxu0 0.0
    %490 = vmatpush1.xpose.msra.mxu0 0.0
    %491 = vmatprep.subr.mxu0 0.0
    %492 = vmatpush1.xpose.msra.mxu0 0.0
    %493 = vmatprep.subr.mxu0 0.0
    %494 = vmatpush1.xpose.msra.mxu0 0.0
    %495 = vmatprep.subr.mxu0 0.0
    %496 = vmatpush1.xpose.msra.mxu0 0.0
    %497 = vmatprep.subr.mxu0 0.0
    %498 = vmatpush1.xpose.msra.mxu0 0.0
    %499 = vmatprep.subr.mxu0 0.0
    %500 = vmatpush1.xpose.msra.mxu0 0.0
    %501 = vmatprep.subr.mxu0 0.0
    %502 = vmatpush1.xpose.msra.mxu0 0.0
    %503 = vmatprep.subr.mxu0 0.0
    %504 = vmatpush1.xpose.msra.mxu0 0.0
    %505 = vmatprep.subr.mxu0 0.0
    %506 = vmatpush1.xpose.msra.mxu0 0.0
    %507 = vmatprep.subr.mxu0 0.0
    %508 = vmatpush1.xpose.msra.mxu0 0.0
    %509 = vmatprep.subr.mxu0 0.0
    %510 = vmatpush1.xpose.msra.mxu0 0.0
    %511 = vmatprep.subr.mxu0 0.0
    %512 = vmatpush1.xpose.msra.mxu0 0.0
    %513 = vmatprep.mubr.f32.mxu0 0.0
    %514 = vmatmul.mubr.f32.gmra.mrb[0].mxu0 %v438
    %v515 = vpop.f32.mrb[0].mxu0
    %v516 = vadd.f32 0.0, %v515
    %v517 = vpop.f32.mrb[0].mxu0
    %518 = vmatprep.mubr.f32.mxu0 0.0
    %519 = vmatmul.mubr.f32.gmra.mrb[0].mxu0 %v441
    %v520 = vpop.f32.mrb[0].mxu0
    %v521 = vadd.f32 0.0, %v520
    %v522 = vpop.f32.mrb[0].mxu0
    %523 = vdwg.mxu0
    %v525 = vsel %vm436, %v224, 0
    %v528 = vsel %vm436, %v229, 0
    %v531 = vsel %vm436, %v326, 0
    %v534 = vsel %vm436, %v331, 0
    %536 = vmatprep.subr.mxu0 0.0
    %537 = vmatpush1.xpose.msra.mxu0 %v531
    %538 = vmatprep.subr.mxu0 0.0
    %539 = vmatpush1.xpose.msra.mxu0 %v534
    %540 = vmatprep.subr.mxu0 0.0
    %541 = vmatpush1.xpose.msra.mxu0 0.0
    %542 = vmatprep.subr.mxu0 0.0
    %543 = vmatpush1.xpose.msra.mxu0 0.0
    %544 = vmatprep.subr.mxu0 0.0
    %545 = vmatpush1.xpose.msra.mxu0 0.0
    %546 = vmatprep.subr.mxu0 0.0
    %547 = vmatpush1.xpose.msra.mxu0 0.0
    %548 = vmatprep.subr.mxu0 0.0
    %549 = vmatpush1.xpose.msra.mxu0 0.0
    %550 = vmatprep.subr.mxu0 0.0
    %551 = vmatpush1.xpose.msra.mxu0 0.0
    %552 = vmatprep.subr.mxu0 0.0
    %553 = vmatpush1.xpose.msra.mxu0 0.0
    %554 = vmatprep.subr.mxu0 0.0
    %555 = vmatpush1.xpose.msra.mxu0 0.0
    %556 = vmatprep.subr.mxu0 0.0
    %557 = vmatpush1.xpose.msra.mxu0 0.0
    %558 = vmatprep.subr.mxu0 0.0
    %559 = vmatpush1.xpose.msra.mxu0 0.0
    %560 = vmatprep.subr.mxu0 0.0
    %561 = vmatpush1.xpose.msra.mxu0 0.0
    %562 = vmatprep.subr.mxu0 0.0
    %563 = vmatpush1.xpose.msra.mxu0 0.0
    %564 = vmatprep.subr.mxu0 0.0
    %565 = vmatpush1.xpose.msra.mxu0 0.0
    %566 = vmatprep.subr.mxu0 0.0
    %567 = vmatpush1.xpose.msra.mxu0 0.0
    %568 = vmatprep.subr.mxu0 0.0
    %569 = vmatpush1.xpose.msra.mxu0 0.0
    %570 = vmatprep.subr.mxu0 0.0
    %571 = vmatpush1.xpose.msra.mxu0 0.0
    %572 = vmatprep.subr.mxu0 0.0
    %573 = vmatpush1.xpose.msra.mxu0 0.0
    %574 = vmatprep.subr.mxu0 0.0
    %575 = vmatpush1.xpose.msra.mxu0 0.0
    %576 = vmatprep.subr.mxu0 0.0
    %577 = vmatpush1.xpose.msra.mxu0 0.0
    %578 = vmatprep.subr.mxu0 0.0
    %579 = vmatpush1.xpose.msra.mxu0 0.0
    %580 = vmatprep.subr.mxu0 0.0
    %581 = vmatpush1.xpose.msra.mxu0 0.0
    %582 = vmatprep.subr.mxu0 0.0
    %583 = vmatpush1.xpose.msra.mxu0 0.0
    %584 = vmatprep.subr.mxu0 0.0
    %585 = vmatpush1.xpose.msra.mxu0 0.0
    %586 = vmatprep.subr.mxu0 0.0
    %587 = vmatpush1.xpose.msra.mxu0 0.0
    %588 = vmatprep.subr.mxu0 0.0
    %589 = vmatpush1.xpose.msra.mxu0 0.0
    %590 = vmatprep.subr.mxu0 0.0
    %591 = vmatpush1.xpose.msra.mxu0 0.0
    %592 = vmatprep.subr.mxu0 0.0
    %593 = vmatpush1.xpose.msra.mxu0 0.0
    %594 = vmatprep.subr.mxu0 0.0
    %595 = vmatpush1.xpose.msra.mxu0 0.0
    %596 = vmatprep.subr.mxu0 0.0
    %597 = vmatpush1.xpose.msra.mxu0 0.0
    %598 = vmatprep.subr.mxu0 0.0
    %599 = vmatpush1.xpose.msra.mxu0 0.0
    %600 = vmatprep.mubr.f32.mxu0 0.0
    %601 = vmatmul.mubr.f32.gmra.mrb[0].mxu0 %v525
    %v602 = vpop.f32.mrb[0].mxu0
    %v603 = vadd.f32 0.0, %v602
    %v604 = vpop.f32.mrb[0].mxu0
    %605 = vmatprep.mubr.f32.mxu0 0.0
    %606 = vmatmul.mubr.f32.gmra.mrb[0].mxu0 %v528
    %v607 = vpop.f32.mrb[0].mxu0
    %v608 = vadd.f32 0.0, %v607
    %v609 = vpop.f32.mrb[0].mxu0
    %610 = vdwg.mxu0
    %v611 = vsel %vm436, %v516, -inf
    %612 = vmax.xlane.f32.xlu0 %v611
    %v613 = vpop.xlane.xlu0 %612
    %v614 = vsel %vm436, %v521, -inf
    %615 = vmax.xlane.f32.xlu0 %v614
    %v616 = vpop.xlane.xlu0 %615
    %v617 = vsel %vm436, %v603, -inf
    %618 = vmax.xlane.f32.xlu0 %v617
    %v619 = vpop.xlane.xlu0 %618
    %v620 = vsel %vm436, %v608, -inf
    %621 = vmax.xlane.f32.xlu0 %v620
    %v622 = vpop.xlane.xlu0 %621
    %v623 = vsub.f32 %v516, %v613
    %v624 = vsub.f32 %v521, %v616
    %v625 = vsub.f32 %v603, %v619
    %v626 = vsub.f32 %v608, %v622
    %v627 = vmul.f32 %v623, 1.442695
    %v628 = vpow.pop %v627
    %v629 = vmul.f32 %v624, 1.442695
    %v630 = vpow.pop %v629
    %v631 = vmul.f32 %v625, 1.442695
    %v632 = vpow.pop %v631
    %v633 = vmul.f32 %v626, 1.442695
    %v634 = vpow.pop %v633
    %v635 = vsel %vm436, %v628, 0.0
    %636 = vadd.xlane.f32.xlu0 %v635
    %v637 = vpop.xlane.xlu0 %636
    %v638 = vsel %vm436, %v630, 0.0
    %639 = vadd.xlane.f32.xlu0 %v638
    %v640 = vpop.xlane.xlu0 %639
    %v641 = vsel %vm436, %v632, 0.0
    %642 = vadd.xlane.f32.xlu0 %v641
    %v643 = vpop.xlane.xlu0 %642
    %v644 = vsel %vm436, %v634, 0.0
    %645 = vadd.xlane.f32.xlu0 %v644
    %v646 = vpop.xlane.xlu0 %645
    %v647 = vrcp.pop %v637
    %v648 = vrcp.pop %v640
    %v649 = vrcp.pop %v643
    %v650 = vrcp.pop %v646
    %v651 = vmul.f32 %v628, %v647
    %v652 = vmul.f32 %v630, %v648
    %v653 = vmul.f32 %v632, %v649
    %v654 = vmul.f32 %v634, %v650
    %v656 = vsel %vm436, %v651, 0
    %v659 = vsel %vm436, %v652, 0
    %661 = vmatprep.subr.mxu0 0.0
    %662 = vmatpush1.msra.mxu0 %v418
    %663 = vmatprep.subr.mxu0 0.0
    %664 = vmatpush1.msra.mxu0 %v423
    %665 = vmatprep.subr.mxu0 0.0
    %666 = vmatpush1.msra.mxu0 0.0
    %667 = vmatprep.subr.mxu0 0.0
    %668 = vmatpush1.msra.mxu0 0.0
    %669 = vmatprep.subr.mxu0 0.0
    %670 = vmatpush1.msra.mxu0 0.0
    %671 = vmatprep.subr.mxu0 0.0
    %672 = vmatpush1.msra.mxu0 0.0
    %673 = vmatprep.subr.mxu0 0.0
    %674 = vmatpush1.msra.mxu0 0.0
    %675 = vmatprep.subr.mxu0 0.0
    %676 = vmatpush1.msra.mxu0 0.0
    %677 = vmatprep.subr.mxu0 0.0
    %678 = vmatpush1.msra.mxu0 0.0
    %679 = vmatprep.subr.mxu0 0.0
    %680 = vmatpush1.msra.mxu0 0.0
    %681 = vmatprep.subr.mxu0 0.0
    %682 = vmatpush1.msra.mxu0 0.0
    %683 = vmatprep.subr.mxu0 0.0
    %684 = vmatpush1.msra.mxu0 0.0
    %685 = vmatprep.subr.mxu0 0.0
    %686 = vmatpush1.msra.mxu0 0.0
    %687 = vmatprep.subr.mxu0 0.0
    %688 = vmatpush1.msra.mxu0 0.0
    %689 = vmatprep.subr.mxu0 0.0
    %690 = vmatpush1.msra.mxu0 0.0
    %691 = vmatprep.subr.mxu0 0.0
    %692 = vmatpush1.msra.mxu0 0.0
    %693 = vmatprep.subr.mxu0 0.0
    %694 = vmatpush1.msra.mxu0 0.0
    %695 = vmatprep.subr.mxu0 0.0
    %696 = vmatpush1.msra.mxu0 0.0
    %697 = vmatprep.subr.mxu0 0.0
    %698 = vmatpush1.msra.mxu0 0.0
    %699 = vmatprep.subr.mxu0 0.0
    %700 = vmatpush1.msra.mxu0 0.0
    %701 = vmatprep.subr.mxu0 0.0
    %702 = vmatpush1.msra.mxu0 0.0
    %703 = vmatprep.subr.mxu0 0.0
    %704 = vmatpush1.msra.mxu0 0.0
    %705 = vmatprep.subr.mxu0 0.0
    %706 = vmatpush1.msra.mxu0 0.0
    %707 = vmatprep.subr.mxu0 0.0
    %708 = vmatpush1.msra.mxu0 0.0
    %709 = vmatprep.subr.mxu0 0.0
    %710 = vmatpush1.msra.mxu0 0.0
    %711 = vmatprep.subr.mxu0 0.0
    %712 = vmatpush1.msra.mxu0 0.0
    %713 = vmatprep.subr.mxu0 0.0
    %714 = vmatpush1.msra.mxu0 0.0
    %715 = vmatprep.subr.mxu0 0.0
    %716 = vmatpush1.msra.mxu0 0.0
    %717 = vmatprep.subr.mxu0 0.0
    %718 = vmatpush1.msra.mxu0 0.0
    %719 = vmatprep.subr.mxu0 0.0
    %720 = vmatpush1.msra.mxu0 0.0
    %721 = vmatprep.subr.mxu0 0.0
    %722 = vmatpush1.msra.mxu0 0.0
    %723 = vmatprep.subr.mxu0 0.0
    %724 = vmatpush1.msra.mxu0 0.0
    %725 = vmatprep.mubr.f32.mxu0 0.0
    %726 = vmatmul.mubr.f32.gmra.mrb[0].mxu0 %v656
    %v727 = vpop.f32.mrb[0].mxu0
    %v728 = vadd.f32 0.0, %v727
    %v729 = vpop.f32.mrb[0].mxu0
    %730 = vmatprep.mubr.f32.mxu0 0.0
    %731 = vmatmul.mubr.f32.gmra.mrb[0].mxu0 %v659
    %v732 = vpop.f32.mrb[0].mxu0
    %v733 = vadd.f32 0.0, %v732
    %v734 = vpop.f32.mrb[0].mxu0
    %735 = vdwg.mxu0
    %v737 = vsel %vm436, %v653, 0
    %v740 = vsel %vm436, %v654, 0
    %742 = vmatprep.subr.mxu0 0.0
    %743 = vmatpush1.msra.mxu0 %v428
    %744 = vmatprep.subr.mxu0 0.0
    %745 = vmatpush1.msra.mxu0 %v433
    %746 = vmatprep.subr.mxu0 0.0
    %747 = vmatpush1.msra.mxu0 0.0
    %748 = vmatprep.subr.mxu0 0.0
    %749 = vmatpush1.msra.mxu0 0.0
    %750 = vmatprep.subr.mxu0 0.0
    %751 = vmatpush1.msra.mxu0 0.0
    %752 = vmatprep.subr.mxu0 0.0
    %753 = vmatpush1.msra.mxu0 0.0
    %754 = vmatprep.subr.mxu0 0.0
    %755 = vmatpush1.msra.mxu0 0.0
    %756 = vmatprep.subr.mxu0 0.0
    %757 = vmatpush1.msra.mxu0 0.0
    %758 = vmatprep.subr.mxu0 0.0
    %759 = vmatpush1.msra.mxu0 0.0
    %760 = vmatprep.subr.mxu0 0.0
    %761 = vmatpush1.msra.mxu0 0.0
    %762 = vmatprep.subr.mxu0 0.0
    %763 = vmatpush1.msra.mxu0 0.0
    %764 = vmatprep.subr.mxu0 0.0
    %765 = vmatpush1.msra.mxu0 0.0
    %766 = vmatprep.subr.mxu0 0.0
    %767 = vmatpush1.msra.mxu0 0.0
    %768 = vmatprep.subr.mxu0 0.0
    %769 = vmatpush1.msra.mxu0 0.0
    %770 = vmatprep.subr.mxu0 0.0
    %771 = vmatpush1.msra.mxu0 0.0
    %772 = vmatprep.subr.mxu0 0.0
    %773 = vmatpush1.msra.mxu0 0.0
    %774 = vmatprep.subr.mxu0 0.0
    %775 = vmatpush1.msra.mxu0 0.0
    %776 = vmatprep.subr.mxu0 0.0
    %777 = vmatpush1.msra.mxu0 0.0
    %778 = vmatprep.subr.mxu0 0.0
    %779 = vmatpush1.msra.mxu0 0.0
    %780 = vmatprep.subr.mxu0 0.0
    %781 = vmatpush1.msra.mxu0 0.0
    %782 = vmatprep.subr.mxu0 0.0
    %783 = vmatpush1.msra.mxu0 0.0
    %784 = vmatprep.subr.mxu0 0.0
    %785 = vmatpush1.msra.mxu0 0.0
    %786 = vmatprep.subr.mxu0 0.0
    %787 = vmatpush1.msra.mxu0 0.0
    %788 = vmatprep.subr.mxu0 0.0
    %789 = vmatpush1.msra.mxu0 0.0
    %790 = vmatprep.subr.mxu0 0.0
    %791 = vmatpush1.msra.mxu0 0.0
    %792 = vmatprep.subr.mxu0 0.0
    %793 = vmatpush1.msra.mxu0 0.0
    %794 = vmatprep.subr.mxu0 0.0
    %795 = vmatpush1.msra.mxu0 0.0
    %796 = vmatprep.subr.mxu0 0.0
    %797 = vmatpush1.msra.mxu0 0.0
    %798 = vmatprep.subr.mxu0 0.0
    %799 = vmatpush1.msra.mxu0 0.0
    %800 = vmatprep.subr.mxu0 0.0
    %801 = vmatpush1.msra.mxu0 0.0
    %802 = vmatprep.subr.mxu0 0.0
    %803 = vmatpush1.msra.mxu0 0.0
    %804 = vmatprep.subr.mxu0 0.0
    %805 = vmatpush1.msra.mxu0 0.0
    %806 = vmatprep.mubr.f32.mxu0 0.0
    %807 = vmatmul.mubr.f32.gmra.mrb[0].mxu0 %v737
    %v808 = vpop.f32.mrb[0].mxu0
    %v809 = vadd.f32 0.0, %v808
    %v810 = vpop.f32.mrb[0].mxu0
    %811 = vmatprep.mubr.f32.mxu0 0.0
    %812 = vmatmul.mubr.f32.gmra.mrb[0].mxu0 %v740
    %v813 = vpop.f32.mrb[0].mxu0
    %v814 = vadd.f32 0.0, %v813
    %v815 = vpop.f32.mrb[0].mxu0
    %816 = vdwg.mxu0
    %817 = vrot.lane.b32.xlu0 %v214, 112
    %v818 = vpop.permute.xlu0 %817
    %819 = vrot.lane.b32.xlu0 %v219, 112
    %v820 = vpop.permute.xlu0 %819
    %821 = vrot.lane.b32.xlu0 %v316, 112
    %v822 = vpop.permute.xlu0 %821
    %823 = vrot.lane.b32.xlu0 %v321, 112
    %v824 = vpop.permute.xlu0 %823
    %v825 = vsel %vm436, %v818, 0
    %v827 = vsel %vm436, %v820, 0
    %v829 = vsel %vm436, %v822, 0
    %v831 = vsel %vm436, %v824, 0
    %833 = vmatprep.subr.mxu0 0.0
    %834 = vmatpush1.xpose.msra.mxu0 %v829
    %835 = vmatprep.subr.mxu0 0.0
    %836 = vmatpush1.xpose.msra.mxu0 %v831
    %837 = vmatprep.subr.mxu0 0.0
    %838 = vmatpush1.xpose.msra.mxu0 0.0
    %839 = vmatprep.subr.mxu0 0.0
    %840 = vmatpush1.xpose.msra.mxu0 0.0
    %841 = vmatprep.subr.mxu0 0.0
    %842 = vmatpush1.xpose.msra.mxu0 0.0
    %843 = vmatprep.subr.mxu0 0.0
    %844 = vmatpush1.xpose.msra.mxu0 0.0
    %845 = vmatprep.subr.mxu0 0.0
    %846 = vmatpush1.xpose.msra.mxu0 0.0
    %847 = vmatprep.subr.mxu0 0.0
    %848 = vmatpush1.xpose.msra.mxu0 0.0
    %849 = vmatprep.subr.mxu0 0.0
    %850 = vmatpush1.xpose.msra.mxu0 0.0
    %851 = vmatprep.subr.mxu0 0.0
    %852 = vmatpush1.xpose.msra.mxu0 0.0
    %853 = vmatprep.subr.mxu0 0.0
    %854 = vmatpush1.xpose.msra.mxu0 0.0
    %855 = vmatprep.subr.mxu0 0.0
    %856 = vmatpush1.xpose.msra.mxu0 0.0
    %857 = vmatprep.subr.mxu0 0.0
    %858 = vmatpush1.xpose.msra.mxu0 0.0
    %859 = vmatprep.subr.mxu0 0.0
    %860 = vmatpush1.xpose.msra.mxu0 0.0
    %861 = vmatprep.subr.mxu0 0.0
    %862 = vmatpush1.xpose.msra.mxu0 0.0
    %863 = vmatprep.subr.mxu0 0.0
    %864 = vmatpush1.xpose.msra.mxu0 0.0
    %865 = vmatprep.subr.mxu0 0.0
    %866 = vmatpush1.xpose.msra.mxu0 0.0
    %867 = vmatprep.subr.mxu0 0.0
    %868 = vmatpush1.xpose.msra.mxu0 0.0
    %869 = vmatprep.subr.mxu0 0.0
    %870 = vmatpush1.xpose.msra.mxu0 0.0
    %871 = vmatprep.subr.mxu0 0.0
    %872 = vmatpush1.xpose.msra.mxu0 0.0
    %873 = vmatprep.subr.mxu0 0.0
    %874 = vmatpush1.xpose.msra.mxu0 0.0
    %875 = vmatprep.subr.mxu0 0.0
    %876 = vmatpush1.xpose.msra.mxu0 0.0
    %877 = vmatprep.subr.mxu0 0.0
    %878 = vmatpush1.xpose.msra.mxu0 0.0
    %879 = vmatprep.subr.mxu0 0.0
    %880 = vmatpush1.xpose.msra.mxu0 0.0
    %881 = vmatprep.subr.mxu0 0.0
    %882 = vmatpush1.xpose.msra.mxu0 0.0
    %883 = vmatprep.subr.mxu0 0.0
    %884 = vmatpush1.xpose.msra.mxu0 0.0
    %885 = vmatprep.subr.mxu0 0.0
    %886 = vmatpush1.xpose.msra.mxu0 0.0
    %887 = vmatprep.subr.mxu0 0.0
    %888 = vmatpush1.xpose.msra.mxu0 0.0
    %889 = vmatprep.subr.mxu0 0.0
    %890 = vmatpush1.xpose.msra.mxu0 0.0
    %891 = vmatprep.subr.mxu0 0.0
    %892 = vmatpush1.xpose.msra.mxu0 0.0
    %893 = vmatprep.subr.mxu0 0.0
    %894 = vmatpush1.xpose.msra.mxu0 0.0
    %895 = vmatprep.subr.mxu0 0.0
    %896 = vmatpush1.xpose.msra.mxu0 0.0
    %897 = vmatprep.mubr.f32.mxu0 0.0
    %898 = vmatmul.mubr.f32.gmra.mrb[0].mxu0 %v825
    %v899 = vpop.f32.mrb[0].mxu0
    %v900 = vadd.f32 0.0, %v899
    %v901 = vpop.f32.mrb[0].mxu0
    %902 = vmatprep.mubr.f32.mxu0 0.0
    %903 = vmatmul.mubr.f32.gmra.mrb[0].mxu0 %v827
    %v904 = vpop.f32.mrb[0].mxu0
    %v905 = vadd.f32 0.0, %v904
    %v906 = vpop.f32.mrb[0].mxu0
    %907 = vdwg.mxu0
    %908 = vrot.lane.b32.xlu0 %v224, 112
    %v909 = vpop.permute.xlu0 %908
    %910 = vrot.lane.b32.xlu0 %v229, 112
    %v911 = vpop.permute.xlu0 %910
    %912 = vrot.lane.b32.xlu0 %v326, 112
    %v913 = vpop.permute.xlu0 %912
    %914 = vrot.lane.b32.xlu0 %v331, 112
    %v915 = vpop.permute.xlu0 %914
    %v916 = vsel %vm436, %v909, 0
    %v918 = vsel %vm436, %v911, 0
    %v920 = vsel %vm436, %v913, 0
    %v922 = vsel %vm436, %v915, 0
    %924 = vmatprep.subr.mxu0 0.0
    %925 = vmatpush1.xpose.msra.mxu0 %v920
    %926 = vmatprep.subr.mxu0 0.0
    %927 = vmatpush1.xpose.msra.mxu0 %v922
    %928 = vmatprep.subr.mxu0 0.0
    %929 = vmatpush1.xpose.msra.mxu0 0.0
    %930 = vmatprep.subr.mxu0 0.0
    %931 = vmatpush1.xpose.msra.mxu0 0.0
    %932 = vmatprep.subr.mxu0 0.0
    %933 = vmatpush1.xpose.msra.mxu0 0.0
    %934 = vmatprep.subr.mxu0 0.0
    %935 = vmatpush1.xpose.msra.mxu0 0.0
    %936 = vmatprep.subr.mxu0 0.0
    %937 = vmatpush1.xpose.msra.mxu0 0.0
    %938 = vmatprep.subr.mxu0 0.0
    %939 = vmatpush1.xpose.msra.mxu0 0.0
    %940 = vmatprep.subr.mxu0 0.0
    %941 = vmatpush1.xpose.msra.mxu0 0.0
    %942 = vmatprep.subr.mxu0 0.0
    %943 = vmatpush1.xpose.msra.mxu0 0.0
    %944 = vmatprep.subr.mxu0 0.0
    %945 = vmatpush1.xpose.msra.mxu0 0.0
    %946 = vmatprep.subr.mxu0 0.0
    %947 = vmatpush1.xpose.msra.mxu0 0.0
    %948 = vmatprep.subr.mxu0 0.0
    %949 = vmatpush1.xpose.msra.mxu0 0.0
    %950 = vmatprep.subr.mxu0 0.0
    %951 = vmatpush1.xpose.msra.mxu0 0.0
    %952 = vmatprep.subr.mxu0 0.0
    %953 = vmatpush1.xpose.msra.mxu0 0.0
    %954 = vmatprep.subr.mxu0 0.0
    %955 = vmatpush1.xpose.msra.mxu0 0.0
    %956 = vmatprep.subr.mxu0 0.0
    %957 = vmatpush1.xpose.msra.mxu0 0.0
    %958 = vmatprep.subr.mxu0 0.0
    %959 = vmatpush1.xpose.msra.mxu0 0.0
    %960 = vmatprep.subr.mxu0 0.0
    %961 = vmatpush1.xpose.msra.mxu0 0.0
    %962 = vmatprep.subr.mxu0 0.0
    %963 = vmatpush1.xpose.msra.mxu0 0.0
    %964 = vmatprep.subr.mxu0 0.0
    %965 = vmatpush1.xpose.msra.mxu0 0.0
    %966 = vmatprep.subr.mxu0 0.0
    %967 = vmatpush1.xpose.msra.mxu0 0.0
    %968 = vmatprep.subr.mxu0 0.0
    %969 = vmatpush1.xpose.msra.mxu0 0.0
    %970 = vmatprep.subr.mxu0 0.0
    %971 = vmatpush1.xpose.msra.mxu0 0.0
    %972 = vmatprep.subr.mxu0 0.0
    %973 = vmatpush1.xpose.msra.mxu0 0.0
    %974 = vmatprep.subr.mxu0 0.0
    %975 = vmatpush1.xpose.msra.mxu0 0.0
    %976 = vmatprep.subr.mxu0 0.0
    %977 = vmatpush1.xpose.msra.mxu0 0.0
    %978 = vmatprep.subr.mxu0 0.0
    %979 = vmatpush1.xpose.msra.mxu0 0.0
    %980 = vmatprep.subr.mxu0 0.0
    %981 = vmatpush1.xpose.msra.mxu0 0.0
    %982 = vmatprep.subr.mxu0 0.0
    %983 = vmatpush1.xpose.msra.mxu0 0.0
    %984 = vmatprep.subr.mxu0 0.0
    %985 = vmatpush1.xpose.msra.mxu0 0.0
    %986 = vmatprep.subr.mxu0 0.0
    %987 = vmatpush1.xpose.msra.mxu0 0.0
    %988 = vmatprep.mubr.f32.mxu0 0.0
    %989 = vmatmul.mubr.f32.gmra.mrb[0].mxu0 %v916
    %v990 = vpop.f32.mrb[0].mxu0
    %v991 = vadd.f32 0.0, %v990
    %v992 = vpop.f32.mrb[0].mxu0
    %993 = vmatprep.mubr.f32.mxu0 0.0
    %994 = vmatmul.mubr.f32.gmra.mrb[0].mxu0 %v918
    %v995 = vpop.f32.mrb[0].mxu0
    %v996 = vadd.f32 0.0, %v995
    %v997 = vpop.f32.mrb[0].mxu0
    %998 = vdwg.mxu0
    %v999 = vsel %vm436, %v900, -inf
    %1000 = vmax.xlane.f32.xlu0 %v999
    %v1001 = vpop.xlane.xlu0 %1000
    %v1002 = vsel %vm436, %v905, -inf
    %1003 = vmax.xlane.f32.xlu0 %v1002
    %v1004 = vpop.xlane.xlu0 %1003
    %v1005 = vsel %vm436, %v991, -inf
    %1006 = vmax.xlane.f32.xlu0 %v1005
    %v1007 = vpop.xlane.xlu0 %1006
    %v1008 = vsel %vm436, %v996, -inf
    %1009 = vmax.xlane.f32.xlu0 %v1008
    %v1010 = vpop.xlane.xlu0 %1009
    %v1011 = vsub.f32 %v900, %v1001
    %v1012 = vsub.f32 %v905, %v1004
    %v1013 = vsub.f32 %v991, %v1007
    %v1014 = vsub.f32 %v996, %v1010
    %v1015 = vmul.f32 %v1011, 1.442695
    %v1016 = vpow.pop %v1015
    %v1017 = vmul.f32 %v1012, 1.442695
    %v1018 = vpow.pop %v1017
    %v1019 = vmul.f32 %v1013, 1.442695
    %v1020 = vpow.pop %v1019
    %v1021 = vmul.f32 %v1014, 1.442695
    %v1022 = vpow.pop %v1021
    %v1023 = vsel %vm436, %v1016, 0.0
    %1024 = vadd.xlane.f32.xlu0 %v1023
    %v1025 = vpop.xlane.xlu0 %1024
    %v1026 = vsel %vm436, %v1018, 0.0
    %1027 = vadd.xlane.f32.xlu0 %v1026
    %v1028 = vpop.xlane.xlu0 %1027
    %v1029 = vsel %vm436, %v1020, 0.0
    %1030 = vadd.xlane.f32.xlu0 %v1029
    %v1031 = vpop.xlane.xlu0 %1030
    %v1032 = vsel %vm436, %v1022, 0.0
    %1033 = vadd.xlane.f32.xlu0 %v1032
    %v1034 = vpop.xlane.xlu0 %1033
    %v1035 = vrcp.pop %v1025
    %v1036 = vrcp.pop %v1028
    %v1037 = vrcp.pop %v1031
    %v1038 = vrcp.pop %v1034
    %v1039 = vmul.f32 %v1016, %v1035
    %v1040 = vmul.f32 %v1018, %v1036
    %v1041 = vmul.f32 %v1020, %v1037
    %v1042 = vmul.f32 %v1022, %v1038
    %1045 = vrot.lane.b32.xlu0 %v418, 112
    %v1046 = vpop.permute.xlu0 %1045
    %1047 = vrot.lane.b32.xlu0 %v423, 112
    %v1048 = vpop.permute.xlu0 %1047
    %v1052 = vsel %vm436, %v1039, 0
    %v1055 = vsel %vm436, %v1040, 0
    %1057 = vmatprep.subr.mxu0 0.0
    %1058 = vmatpush1.msra.mxu0 %v1046
    %1059 = vmatprep.subr.mxu0 0.0
    %1060 = vmatpush1.msra.mxu0 %v1048
    %1061 = vmatprep.subr.mxu0 0.0
    %1062 = vmatpush1.msra.mxu0 0.0
    %1063 = vmatprep.subr.mxu0 0.0
    %1064 = vmatpush1.msra.mxu0 0.0
    %1065 = vmatprep.subr.mxu0 0.0
    %1066 = vmatpush1.msra.mxu0 0.0
    %1067 = vmatprep.subr.mxu0 0.0
    %1068 = vmatpush1.msra.mxu0 0.0
    %1069 = vmatprep.subr.mxu0 0.0
    %1070 = vmatpush1.msra.mxu0 0.0
    %1071 = vmatprep.subr.mxu0 0.0
    %1072 = vmatpush1.msra.mxu0 0.0
    %1073 = vmatprep.subr.mxu0 0.0
    %1074 = vmatpush1.msra.mxu0 0.0
    %1075 = vmatprep.subr.mxu0 0.0
    %1076 = vmatpush1.msra.mxu0 0.0
    %1077 = vmatprep.subr.mxu0 0.0
    %1078 = vmatpush1.msra.mxu0 0.0
    %1079 = vmatprep.subr.mxu0 0.0
    %1080 = vmatpush1.msra.mxu0 0.0
    %1081 = vmatprep.subr.mxu0 0.0
    %1082 = vmatpush1.msra.mxu0 0.0
    %1083 = vmatprep.subr.mxu0 0.0
    %1084 = vmatpush1.msra.mxu0 0.0
    %1085 = vmatprep.subr.mxu0 0.0
    %1086 = vmatpush1.msra.mxu0 0.0
    %1087 = vmatprep.subr.mxu0 0.0
    %1088 = vmatpush1.msra.mxu0 0.0
    %1089 = vmatprep.subr.mxu0 0.0
    %1090 = vmatpush1.msra.mxu0 0.0
    %1091 = vmatprep.subr.mxu0 0.0
    %1092 = vmatpush1.msra.mxu0 0.0
    %1093 = vmatprep.subr.mxu0 0.0
    %1094 = vmatpush1.msra.mxu0 0.0
    %1095 = vmatprep.subr.mxu0 0.0
    %1096 = vmatpush1.msra.mxu0 0.0
    %1097 = vmatprep.subr.mxu0 0.0
    %1098 = vmatpush1.msra.mxu0 0.0
    %1099 = vmatprep.subr.mxu0 0.0
    %1100 = vmatpush1.msra.mxu0 0.0
    %1101 = vmatprep.subr.mxu0 0.0
    %1102 = vmatpush1.msra.mxu0 0.0
    %1103 = vmatprep.subr.mxu0 0.0
    %1104 = vmatpush1.msra.mxu0 0.0
    %1105 = vmatprep.subr.mxu0 0.0
    %1106 = vmatpush1.msra.mxu0 0.0
    %1107 = vmatprep.subr.mxu0 0.0
    %1108 = vmatpush1.msra.mxu0 0.0
    %1109 = vmatprep.subr.mxu0 0.0
    %1110 = vmatpush1.msra.mxu0 0.0
    %1111 = vmatprep.subr.mxu0 0.0
    %1112 = vmatpush1.msra.mxu0 0.0
    %1113 = vmatprep.subr.mxu0 0.0
    %1114 = vmatpush1.msra.mxu0 0.0
    %1115 = vmatprep.subr.mxu0 0.0
    %1116 = vmatpush1.msra.mxu0 0.0
    %1117 = vmatprep.subr.mxu0 0.0
    %1118 = vmatpush1.msra.mxu0 0.0
    %1119 = vmatprep.subr.mxu0 0.0
    %1120 = vmatpush1.msra.mxu0 0.0
    %1121 = vmatprep.mubr.f32.mxu0 0.0
    %1122 = vmatmul.mubr.f32.gmra.mrb[0].mxu0 %v1052
    %v1123 = vpop.f32.mrb[0].mxu0
    %v1124 = vadd.f32 0.0, %v1123
    %v1125 = vpop.f32.mrb[0].mxu0
    %1126 = vmatprep.mubr.f32.mxu0 0.0
    %1127 = vmatmul.mubr.f32.gmra.mrb[0].mxu0 %v1055
    %v1128 = vpop.f32.mrb[0].mxu0
    %v1129 = vadd.f32 0.0, %v1128
    %v1130 = vpop.f32.mrb[0].mxu0
    %1131 = vdwg.mxu0
    %1134 = vrot.lane.b32.xlu0 %v428, 112
    %v1135 = vpop.permute.xlu0 %1134
    %1136 = vrot.lane.b32.xlu0 %v433, 112
    %v1137 = vpop.permute.xlu0 %1136
    %v1141 = vsel %vm436, %v1041, 0
    %v1144 = vsel %vm436, %v1042, 0
    %1146 = vmatprep.subr.mxu0 0.0
    %1147 = vmatpush1.msra.mxu0 %v1135
    %1148 = vmatprep.subr.mxu0 0.0
    %1149 = vmatpush1.msra.mxu0 %v1137
    %1150 = vmatprep.subr.mxu0 0.0
    %1151 = vmatpush1.msra.mxu0 0.0
    %1152 = vmatprep.subr.mxu0 0.0
    %1153 = vmatpush1.msra.mxu0 0.0
    %1154 = vmatprep.subr.mxu0 0.0
    %1155 = vmatpush1.msra.mxu0 0.0
    %1156 = vmatprep.subr.mxu0 0.0
    %1157 = vmatpush1.msra.mxu0 0.0
    %1158 = vmatprep.subr.mxu0 0.0
    %1159 = vmatpush1.msra.mxu0 0.0
    %1160 = vmatprep.subr.mxu0 0.0
    %1161 = vmatpush1.msra.mxu0 0.0
    %1162 = vmatprep.subr.mxu0 0.0
    %1163 = vmatpush1.msra.mxu0 0.0
    %1164 = vmatprep.subr.mxu0 0.0
    %1165 = vmatpush1.msra.mxu0 0.0
    %1166 = vmatprep.subr.mxu0 0.0
    %1167 = vmatpush1.msra.mxu0 0.0
    %1168 = vmatprep.subr.mxu0 0.0
    %1169 = vmatpush1.msra.mxu0 0.0
    %1170 = vmatprep.subr.mxu0 0.0
    %1171 = vmatpush1.msra.mxu0 0.0
    %1172 = vmatprep.subr.mxu0 0.0
    %1173 = vmatpush1.msra.mxu0 0.0
    %1174 = vmatprep.subr.mxu0 0.0
    %1175 = vmatpush1.msra.mxu0 0.0
    %1176 = vmatprep.subr.mxu0 0.0
    %1177 = vmatpush1.msra.mxu0 0.0
    %1178 = vmatprep.subr.mxu0 0.0
    %1179 = vmatpush1.msra.mxu0 0.0
    %1180 = vmatprep.subr.mxu0 0.0
    %1181 = vmatpush1.msra.mxu0 0.0
    %1182 = vmatprep.subr.mxu0 0.0
    %1183 = vmatpush1.msra.mxu0 0.0
    %1184 = vmatprep.subr.mxu0 0.0
    %1185 = vmatpush1.msra.mxu0 0.0
    %1186 = vmatprep.subr.mxu0 0.0
    %1187 = vmatpush1.msra.mxu0 0.0
    %1188 = vmatprep.subr.mxu0 0.0
    %1189 = vmatpush1.msra.mxu0 0.0
    %1190 = vmatprep.subr.mxu0 0.0
    %1191 = vmatpush1.msra.mxu0 0.0
    %1192 = vmatprep.subr.mxu0 0.0
    %1193 = vmatpush1.msra.mxu0 0.0
    %1194 = vmatprep.subr.mxu0 0.0
    %1195 = vmatpush1.msra.mxu0 0.0
    %1196 = vmatprep.subr.mxu0 0.0
    %1197 = vmatpush1.msra.mxu0 0.0
    %1198 = vmatprep.subr.mxu0 0.0
    %1199 = vmatpush1.msra.mxu0 0.0
    %1200 = vmatprep.subr.mxu0 0.0
    %1201 = vmatpush1.msra.mxu0 0.0
    %1202 = vmatprep.subr.mxu0 0.0
    %1203 = vmatpush1.msra.mxu0 0.0
    %1204 = vmatprep.subr.mxu0 0.0
    %1205 = vmatpush1.msra.mxu0 0.0
    %1206 = vmatprep.subr.mxu0 0.0
    %1207 = vmatpush1.msra.mxu0 0.0
    %1208 = vmatprep.subr.mxu0 0.0
    %1209 = vmatpush1.msra.mxu0 0.0
    %1210 = vmatprep.mubr.f32.mxu0 0.0
    %1211 = vmatmul.mubr.f32.gmra.mrb[0].mxu0 %v1141
    %v1212 = vpop.f32.mrb[0].mxu0
    %v1213 = vadd.f32 0.0, %v1212
    %v1214 = vpop.f32.mrb[0].mxu0
    %1215 = vmatprep.mubr.f32.mxu0 0.0
    %1216 = vmatmul.mubr.f32.gmra.mrb[0].mxu0 %v1144
    %v1217 = vpop.f32.mrb[0].mxu0
    %v1218 = vadd.f32 0.0, %v1217
    %v1219 = vpop.f32.mrb[0].mxu0
    %1220 = vdwg.mxu0
    %1221 = vrot.lane.b32.xlu0 %v214, 96
    %v1222 = vpop.permute.xlu0 %1221
    %1223 = vrot.lane.b32.xlu0 %v219, 96
    %v1224 = vpop.permute.xlu0 %1223
    %1225 = vrot.lane.b32.xlu0 %v316, 96
    %v1226 = vpop.permute.xlu0 %1225
    %1227 = vrot.lane.b32.xlu0 %v321, 96
    %v1228 = vpop.permute.xlu0 %1227
    %v1229 = vsel %vm436, %v1222, 0
    %v1231 = vsel %vm436, %v1224, 0
    %v1233 = vsel %vm436, %v1226, 0
    %v1235 = vsel %vm436, %v1228, 0
    %1237 = vmatprep.subr.mxu0 0.0
    %1238 = vmatpush1.xpose.msra.mxu0 %v1233
    %1239 = vmatprep.subr.mxu0 0.0
    %1240 = vmatpush1.xpose.msra.mxu0 %v1235
    %1241 = vmatprep.subr.mxu0 0.0
    %1242 = vmatpush1.xpose.msra.mxu0 0.0
    %1243 = vmatprep.subr.mxu0 0.0
    %1244 = vmatpush1.xpose.msra.mxu0 0.0
    %1245 = vmatprep.subr.mxu0 0.0
    %1246 = vmatpush1.xpose.msra.mxu0 0.0
    %1247 = vmatprep.subr.mxu0 0.0
    %1248 = vmatpush1.xpose.msra.mxu0 0.0
    %1249 = vmatprep.subr.mxu0 0.0
    %1250 = vmatpush1.xpose.msra.mxu0 0.0
    %1251 = vmatprep.subr.mxu0 0.0
    %1252 = vmatpush1.xpose.msra.mxu0 0.0
    %1253 = vmatprep.subr.mxu0 0.0
    %1254 = vmatpush1.xpose.msra.mxu0 0.0
    %1255 = vmatprep.subr.mxu0 0.0
    %1256 = vmatpush1.xpose.msra.mxu0 0.0
    %1257 = vmatprep.subr.mxu0 0.0
    %1258 = vmatpush1.xpose.msra.mxu0 0.0
    %1259 = vmatprep.subr.mxu0 0.0
    %1260 = vmatpush1.xpose.msra.mxu0 0.0
    %1261 = vmatprep.subr.mxu0 0.0
    %1262 = vmatpush1.xpose.msra.mxu0 0.0
    %1263 = vmatprep.subr.mxu0 0.0
    %1264 = vmatpush1.xpose.msra.mxu0 0.0
    %1265 = vmatprep.subr.mxu0 0.0
    %1266 = vmatpush1.xpose.msra.mxu0 0.0
    %1267 = vmatprep.subr.mxu0 0.0
    %1268 = vmatpush1.xpose.msra.mxu0 0.0
    %1269 = vmatprep.subr.mxu0 0.0
    %1270 = vmatpush1.xpose.msra.mxu0 0.0
    %1271 = vmatprep.subr.mxu0 0.0
    %1272 = vmatpush1.xpose.msra.mxu0 0.0
    %1273 = vmatprep.subr.mxu0 0.0
    %1274 = vmatpush1.xpose.msra.mxu0 0.0
    %1275 = vmatprep.subr.mxu0 0.0
    %1276 = vmatpush1.xpose.msra.mxu0 0.0
    %1277 = vmatprep.subr.mxu0 0.0
    %1278 = vmatpush1.xpose.msra.mxu0 0.0
    %1279 = vmatprep.subr.mxu0 0.0
    %1280 = vmatpush1.xpose.msra.mxu0 0.0
    %1281 = vmatprep.subr.mxu0 0.0
    %1282 = vmatpush1.xpose.msra.mxu0 0.0
    %1283 = vmatprep.subr.mxu0 0.0
    %1284 = vmatpush1.xpose.msra.mxu0 0.0
    %1285 = vmatprep.subr.mxu0 0.0
    %1286 = vmatpush1.xpose.msra.mxu0 0.0
    %1287 = vmatprep.subr.mxu0 0.0
    %1288 = vmatpush1.xpose.msra.mxu0 0.0
    %1289 = vmatprep.subr.mxu0 0.0
    %1290 = vmatpush1.xpose.msra.mxu0 0.0
    %1291 = vmatprep.subr.mxu0 0.0
    %1292 = vmatpush1.xpose.msra.mxu0 0.0
    %1293 = vmatprep.subr.mxu0 0.0
    %1294 = vmatpush1.xpose.msra.mxu0 0.0
    %1295 = vmatprep.subr.mxu0 0.0
    %1296 = vmatpush1.xpose.msra.mxu0 0.0
    %1297 = vmatprep.subr.mxu0 0.0
    %1298 = vmatpush1.xpose.msra.mxu0 0.0
    %1299 = vmatprep.subr.mxu0 0.0
    %1300 = vmatpush1.xpose.msra.mxu0 0.0
    %1301 = vmatprep.mubr.f32.mxu0 0.0
    %1302 = vmatmul.mubr.f32.gmra.mrb[0].mxu0 %v1229
    %v1303 = vpop.f32.mrb[0].mxu0
    %v1304 = vadd.f32 0.0, %v1303
    %v1305 = vpop.f32.mrb[0].mxu0
    %1306 = vmatprep.mubr.f32.mxu0 0.0
    %1307 = vmatmul.mubr.f32.gmra.mrb[0].mxu0 %v1231
    %v1308 = vpop.f32.mrb[0].mxu0
    %v1309 = vadd.f32 0.0, %v1308
    %v1310 = vpop.f32.mrb[0].mxu0
    %1311 = vdwg.mxu0
    %1312 = vrot.lane.b32.xlu0 %v224, 96
    %v1313 = vpop.permute.xlu0 %1312
    %1314 = vrot.lane.b32.xlu0 %v229, 96
    %v1315 = vpop.permute.xlu0 %1314
    %1316 = vrot.lane.b32.xlu0 %v326, 96
    %v1317 = vpop.permute.xlu0 %1316
    %1318 = vrot.lane.b32.xlu0 %v331, 96
    %v1319 = vpop.permute.xlu0 %1318
    %v1320 = vsel %vm436, %v1313, 0
    %v1322 = vsel %vm436, %v1315, 0
    %v1324 = vsel %vm436, %v1317, 0
    %v1326 = vsel %vm436, %v1319, 0
    %1328 = vmatprep.subr.mxu0 0.0
    %1329 = vmatpush1.xpose.msra.mxu0 %v1324
    %1330 = vmatprep.subr.mxu0 0.0
    %1331 = vmatpush1.xpose.msra.mxu0 %v1326
    %1332 = vmatprep.subr.mxu0 0.0
    %1333 = vmatpush1.xpose.msra.mxu0 0.0
    %1334 = vmatprep.subr.mxu0 0.0
    %1335 = vmatpush1.xpose.msra.mxu0 0.0
    %1336 = vmatprep.subr.mxu0 0.0
    %1337 = vmatpush1.xpose.msra.mxu0 0.0
    %1338 = vmatprep.subr.mxu0 0.0
    %1339 = vmatpush1.xpose.msra.mxu0 0.0
    %1340 = vmatprep.subr.mxu0 0.0
    %1341 = vmatpush1.xpose.msra.mxu0 0.0
    %1342 = vmatprep.subr.mxu0 0.0
    %1343 = vmatpush1.xpose.msra.mxu0 0.0
    %1344 = vmatprep.subr.mxu0 0.0
    %1345 = vmatpush1.xpose.msra.mxu0 0.0
    %1346 = vmatprep.subr.mxu0 0.0
    %1347 = vmatpush1.xpose.msra.mxu0 0.0
    %1348 = vmatprep.subr.mxu0 0.0
    %1349 = vmatpush1.xpose.msra.mxu0 0.0
    %1350 = vmatprep.subr.mxu0 0.0
    %1351 = vmatpush1.xpose.msra.mxu0 0.0
    %1352 = vmatprep.subr.mxu0 0.0
    %1353 = vmatpush1.xpose.msra.mxu0 0.0
    %1354 = vmatprep.subr.mxu0 0.0
    %1355 = vmatpush1.xpose.msra.mxu0 0.0
    %1356 = vmatprep.subr.mxu0 0.0
    %1357 = vmatpush1.xpose.msra.mxu0 0.0
    %1358 = vmatprep.subr.mxu0 0.0
    %1359 = vmatpush1.xpose.msra.mxu0 0.0
    %1360 = vmatprep.subr.mxu0 0.0
    %1361 = vmatpush1.xpose.msra.mxu0 0.0
    %1362 = vmatprep.subr.mxu0 0.0
    %1363 = vmatpush1.xpose.msra.mxu0 0.0
    %1364 = vmatprep.subr.mxu0 0.0
    %1365 = vmatpush1.xpose.msra.mxu0 0.0
    %1366 = vmatprep.subr.mxu0 0.0
    %1367 = vmatpush1.xpose.msra.mxu0 0.0
    %1368 = vmatprep.subr.mxu0 0.0
    %1369 = vmatpush1.xpose.msra.mxu0 0.0
    %1370 = vmatprep.subr.mxu0 0.0
    %1371 = vmatpush1.xpose.msra.mxu0 0.0
    %1372 = vmatprep.subr.mxu0 0.0
    %1373 = vmatpush1.xpose.msra.mxu0 0.0
    %1374 = vmatprep.subr.mxu0 0.0
    %1375 = vmatpush1.xpose.msra.mxu0 0.0
    %1376 = vmatprep.subr.mxu0 0.0
    %1377 = vmatpush1.xpose.msra.mxu0 0.0
    %1378 = vmatprep.subr.mxu0 0.0
    %1379 = vmatpush1.xpose.msra.mxu0 0.0
    %1380 = vmatprep.subr.mxu0 0.0
    %1381 = vmatpush1.xpose.msra.mxu0 0.0
    %1382 = vmatprep.subr.mxu0 0.0
    %1383 = vmatpush1.xpose.msra.mxu0 0.0
    %1384 = vmatprep.subr.mxu0 0.0
    %1385 = vmatpush1.xpose.msra.mxu0 0.0
    %1386 = vmatprep.subr.mxu0 0.0
    %1387 = vmatpush1.xpose.msra.mxu0 0.0
    %1388 = vmatprep.subr.mxu0 0.0
    %1389 = vmatpush1.xpose.msra.mxu0 0.0
    %1390 = vmatprep.subr.mxu0 0.0
    %1391 = vmatpush1.xpose.msra.mxu0 0.0
    %1392 = vmatprep.mubr.f32.mxu0 0.0
    %1393 = vmatmul.mubr.f32.gmra.mrb[0].mxu0 %v1320
    %v1394 = vpop.f32.mrb[0].mxu0
    %v1395 = vadd.f32 0.0, %v1394
    %v1396 = vpop.f32.mrb[0].mxu0
    %1397 = vmatprep.mubr.f32.mxu0 0.0
    %1398 = vmatmul.mubr.f32.gmra.mrb[0].mxu0 %v1322
    %v1399 = vpop.f32.mrb[0].mxu0
    %v1400 = vadd.f32 0.0, %v1399
    %v1401 = vpop.f32.mrb[0].mxu0
    %1402 = vdwg.mxu0
    %v1403 = vsel %vm436, %v1304, -inf
    %1404 = vmax.xlane.f32.xlu0 %v1403
    %v1405 = vpop.xlane.xlu0 %1404
    %v1406 = vsel %vm436, %v1309, -inf
    %1407 = vmax.xlane.f32.xlu0 %v1406
    %v1408 = vpop.xlane.xlu0 %1407
    %v1409 = vsel %vm436, %v1395, -inf
    %1410 = vmax.xlane.f32.xlu0 %v1409
    %v1411 = vpop.xlane.xlu0 %1410
    %v1412 = vsel %vm436, %v1400, -inf
    %1413 = vmax.xlane.f32.xlu0 %v1412
    %v1414 = vpop.xlane.xlu0 %1413
    %v1415 = vsub.f32 %v1304, %v1405
    %v1416 = vsub.f32 %v1309, %v1408
    %v1417 = vsub.f32 %v1395, %v1411
    %v1418 = vsub.f32 %v1400, %v1414
    %v1419 = vmul.f32 %v1415, 1.442695
    %v1420 = vpow.pop %v1419
    %v1421 = vmul.f32 %v1416, 1.442695
    %v1422 = vpow.pop %v1421
    %v1423 = vmul.f32 %v1417, 1.442695
    %v1424 = vpow.pop %v1423
    %v1425 = vmul.f32 %v1418, 1.442695
    %v1426 = vpow.pop %v1425
    %v1427 = vsel %vm436, %v1420, 0.0
    %1428 = vadd.xlane.f32.xlu0 %v1427
    %v1429 = vpop.xlane.xlu0 %1428
    %v1430 = vsel %vm436, %v1422, 0.0
    %1431 = vadd.xlane.f32.xlu0 %v1430
    %v1432 = vpop.xlane.xlu0 %1431
    %v1433 = vsel %vm436, %v1424, 0.0
    %1434 = vadd.xlane.f32.xlu0 %v1433
    %v1435 = vpop.xlane.xlu0 %1434
    %v1436 = vsel %vm436, %v1426, 0.0
    %1437 = vadd.xlane.f32.xlu0 %v1436
    %v1438 = vpop.xlane.xlu0 %1437
    %v1439 = vrcp.pop %v1429
    %v1440 = vrcp.pop %v1432
    %v1441 = vrcp.pop %v1435
    %v1442 = vrcp.pop %v1438
    %v1443 = vmul.f32 %v1420, %v1439
    %v1444 = vmul.f32 %v1422, %v1440
    %v1445 = vmul.f32 %v1424, %v1441
    %v1446 = vmul.f32 %v1426, %v1442
    %1447 = vrot.lane.b32.xlu0 %v418, 96
    %v1448 = vpop.permute.xlu0 %1447
    %1449 = vrot.lane.b32.xlu0 %v423, 96
    %v1450 = vpop.permute.xlu0 %1449
    %v1454 = vsel %vm436, %v1443, 0
    %v1457 = vsel %vm436, %v1444, 0
    %1459 = vmatprep.subr.mxu0 0.0
    %1460 = vmatpush1.msra.mxu0 %v1448
    %1461 = vmatprep.subr.mxu0 0.0
    %1462 = vmatpush1.msra.mxu0 %v1450
    %1463 = vmatprep.subr.mxu0 0.0
    %1464 = vmatpush1.msra.mxu0 0.0
    %1465 = vmatprep.subr.mxu0 0.0
    %1466 = vmatpush1.msra.mxu0 0.0
    %1467 = vmatprep.subr.mxu0 0.0
    %1468 = vmatpush1.msra.mxu0 0.0
    %1469 = vmatprep.subr.mxu0 0.0
    %1470 = vmatpush1.msra.mxu0 0.0
    %1471 = vmatprep.subr.mxu0 0.0
    %1472 = vmatpush1.msra.mxu0 0.0
    %1473 = vmatprep.subr.mxu0 0.0
    %1474 = vmatpush1.msra.mxu0 0.0
    %1475 = vmatprep.subr.mxu0 0.0
    %1476 = vmatpush1.msra.mxu0 0.0
    %1477 = vmatprep.subr.mxu0 0.0
    %1478 = vmatpush1.msra.mxu0 0.0
    %1479 = vmatprep.subr.mxu0 0.0
    %1480 = vmatpush1.msra.mxu0 0.0
    %1481 = vmatprep.subr.mxu0 0.0
    %1482 = vmatpush1.msra.mxu0 0.0
    %1483 = vmatprep.subr.mxu0 0.0
    %1484 = vmatpush1.msra.mxu0 0.0
    %1485 = vmatprep.subr.mxu0 0.0
    %1486 = vmatpush1.msra.mxu0 0.0
    %1487 = vmatprep.subr.mxu0 0.0
    %1488 = vmatpush1.msra.mxu0 0.0
    %1489 = vmatprep.subr.mxu0 0.0
    %1490 = vmatpush1.msra.mxu0 0.0
    %1491 = vmatprep.subr.mxu0 0.0
    %1492 = vmatpush1.msra.mxu0 0.0
    %1493 = vmatprep.subr.mxu0 0.0
    %1494 = vmatpush1.msra.mxu0 0.0
    %1495 = vmatprep.subr.mxu0 0.0
    %1496 = vmatpush1.msra.mxu0 0.0
    %1497 = vmatprep.subr.mxu0 0.0
    %1498 = vmatpush1.msra.mxu0 0.0
    %1499 = vmatprep.subr.mxu0 0.0
    %1500 = vmatpush1.msra.mxu0 0.0
    %1501 = vmatprep.subr.mxu0 0.0
    %1502 = vmatpush1.msra.mxu0 0.0
    %1503 = vmatprep.subr.mxu0 0.0
    %1504 = vmatpush1.msra.mxu0 0.0
    %1505 = vmatprep.subr.mxu0 0.0
    %1506 = vmatpush1.msra.mxu0 0.0
    %1507 = vmatprep.subr.mxu0 0.0
    %1508 = vmatpush1.msra.mxu0 0.0
    %1509 = vmatprep.subr.mxu0 0.0
    %1510 = vmatpush1.msra.mxu0 0.0
    %1511 = vmatprep.subr.mxu0 0.0
    %1512 = vmatpush1.msra.mxu0 0.0
    %1513 = vmatprep.subr.mxu0 0.0
    %1514 = vmatpush1.msra.mxu0 0.0
    %1515 = vmatprep.subr.mxu0 0.0
    %1516 = vmatpush1.msra.mxu0 0.0
    %1517 = vmatprep.subr.mxu0 0.0
    %1518 = vmatpush1.msra.mxu0 0.0
    %1519 = vmatprep.subr.mxu0 0.0
    %1520 = vmatpush1.msra.mxu0 0.0
    %1521 = vmatprep.subr.mxu0 0.0
    %1522 = vmatpush1.msra.mxu0 0.0
    %1523 = vmatprep.mubr.f32.mxu0 0.0
    %1524 = vmatmul.mubr.f32.gmra.mrb[0].mxu0 %v1454
    %v1525 = vpop.f32.mrb[0].mxu0
    %v1526 = vadd.f32 0.0, %v1525
    %v1527 = vpop.f32.mrb[0].mxu0
    %1528 = vmatprep.mubr.f32.mxu0 0.0
    %1529 = vmatmul.mubr.f32.gmra.mrb[0].mxu0 %v1457
    %v1530 = vpop.f32.mrb[0].mxu0
    %v1531 = vadd.f32 0.0, %v1530
    %v1532 = vpop.f32.mrb[0].mxu0
    %1533 = vdwg.mxu0
    %1534 = vrot.lane.b32.xlu0 %v428, 96
    %v1535 = vpop.permute.xlu0 %1534
    %1536 = vrot.lane.b32.xlu0 %v433, 96
    %v1537 = vpop.permute.xlu0 %1536
    %v1541 = vsel %vm436, %v1445, 0
    %v1544 = vsel %vm436, %v1446, 0
    %1546 = vmatprep.subr.mxu0 0.0
    %1547 = vmatpush1.msra.mxu0 %v1535
    %1548 = vmatprep.subr.mxu0 0.0
    %1549 = vmatpush1.msra.mxu0 %v1537
    %1550 = vmatprep.subr.mxu0 0.0
    %1551 = vmatpush1.msra.mxu0 0.0
    %1552 = vmatprep.subr.mxu0 0.0
    %1553 = vmatpush1.msra.mxu0 0.0
    %1554 = vmatprep.subr.mxu0 0.0
    %1555 = vmatpush1.msra.mxu0 0.0
    %1556 = vmatprep.subr.mxu0 0.0
    %1557 = vmatpush1.msra.mxu0 0.0
    %1558 = vmatprep.subr.mxu0 0.0
    %1559 = vmatpush1.msra.mxu0 0.0
    %1560 = vmatprep.subr.mxu0 0.0
    %1561 = vmatpush1.msra.mxu0 0.0
    %1562 = vmatprep.subr.mxu0 0.0
    %1563 = vmatpush1.msra.mxu0 0.0
    %1564 = vmatprep.subr.mxu0 0.0
    %1565 = vmatpush1.msra.mxu0 0.0
    %1566 = vmatprep.subr.mxu0 0.0
    %1567 = vmatpush1.msra.mxu0 0.0
    %1568 = vmatprep.subr.mxu0 0.0
    %1569 = vmatpush1.msra.mxu0 0.0
    %1570 = vmatprep.subr.mxu0 0.0
    %1571 = vmatpush1.msra.mxu0 0.0
    %1572 = vmatprep.subr.mxu0 0.0
    %1573 = vmatpush1.msra.mxu0 0.0
    %1574 = vmatprep.subr.mxu0 0.0
    %1575 = vmatpush1.msra.mxu0 0.0
    %1576 = vmatprep.subr.mxu0 0.0
    %1577 = vmatpush1.msra.mxu0 0.0
    %1578 = vmatprep.subr.mxu0 0.0
    %1579 = vmatpush1.msra.mxu0 0.0
    %1580 = vmatprep.subr.mxu0 0.0
    %1581 = vmatpush1.msra.mxu0 0.0
    %1582 = vmatprep.subr.mxu0 0.0
    %1583 = vmatpush1.msra.mxu0 0.0
    %1584 = vmatprep.subr.mxu0 0.0
    %1585 = vmatpush1.msra.mxu0 0.0
    %1586 = vmatprep.subr.mxu0 0.0
    %1587 = vmatpush1.msra.mxu0 0.0
    %1588 = vmatprep.subr.mxu0 0.0
    %1589 = vmatpush1.msra.mxu0 0.0
    %1590 = vmatprep.subr.mxu0 0.0
    %1591 = vmatpush1.msra.mxu0 0.0
    %1592 = vmatprep.subr.mxu0 0.0
    %1593 = vmatpush1.msra.mxu0 0.0
    %1594 = vmatprep.subr.mxu0 0.0
    %1595 = vmatpush1.msra.mxu0 0.0
    %1596 = vmatprep.subr.mxu0 0.0
    %1597 = vmatpush1.msra.mxu0 0.0
    %1598 = vmatprep.subr.mxu0 0.0
    %1599 = vmatpush1.msra.mxu0 0.0
    %1600 = vmatprep.subr.mxu0 0.0
    %1601 = vmatpush1.msra.mxu0 0.0
    %1602 = vmatprep.subr.mxu0 0.0
    %1603 = vmatpush1.msra.mxu0 0.0
    %1604 = vmatprep.subr.mxu0 0.0
    %1605 = vmatpush1.msra.mxu0 0.0
    %1606 = vmatprep.subr.mxu0 0.0
    %1607 = vmatpush1.msra.mxu0 0.0
    %1608 = vmatprep.subr.mxu0 0.0
    %1609 = vmatpush1.msra.mxu0 0.0
    %1610 = vmatprep.mubr.f32.mxu0 0.0
    %1611 = vmatmul.mubr.f32.gmra.mrb[0].mxu0 %v1541
    %v1612 = vpop.f32.mrb[0].mxu0
    %v1613 = vadd.f32 0.0, %v1612
    %v1614 = vpop.f32.mrb[0].mxu0
    %1615 = vmatprep.mubr.f32.mxu0 0.0
    %1616 = vmatmul.mubr.f32.gmra.mrb[0].mxu0 %v1544
    %v1617 = vpop.f32.mrb[0].mxu0
    %v1618 = vadd.f32 0.0, %v1617
    %v1619 = vpop.f32.mrb[0].mxu0
    %1620 = vdwg.mxu0
    %1621 = vrot.lane.b32.xlu0 %v214, 80
    %v1622 = vpop.permute.xlu0 %1621
    %1623 = vrot.lane.b32.xlu0 %v219, 80
    %v1624 = vpop.permute.xlu0 %1623
    %1625 = vrot.lane.b32.xlu0 %v316, 80
    %v1626 = vpop.permute.xlu0 %1625
    %1627 = vrot.lane.b32.xlu0 %v321, 80
    %v1628 = vpop.permute.xlu0 %1627
    %v1629 = vsel %vm436, %v1622, 0
    %v1631 = vsel %vm436, %v1624, 0
    %v1633 = vsel %vm436, %v1626, 0
    %v1635 = vsel %vm436, %v1628, 0
    %1637 = vmatprep.subr.mxu0 0.0
    %1638 = vmatpush1.xpose.msra.mxu0 %v1633
    %1639 = vmatprep.subr.mxu0 0.0
    %1640 = vmatpush1.xpose.msra.mxu0 %v1635
    %1641 = vmatprep.subr.mxu0 0.0
    %1642 = vmatpush1.xpose.msra.mxu0 0.0
    %1643 = vmatprep.subr.mxu0 0.0
    %1644 = vmatpush1.xpose.msra.mxu0 0.0
    %1645 = vmatprep.subr.mxu0 0.0
    %1646 = vmatpush1.xpose.msra.mxu0 0.0
    %1647 = vmatprep.subr.mxu0 0.0
    %1648 = vmatpush1.xpose.msra.mxu0 0.0
    %1649 = vmatprep.subr.mxu0 0.0
    %1650 = vmatpush1.xpose.msra.mxu0 0.0
    %1651 = vmatprep.subr.mxu0 0.0
    %1652 = vmatpush1.xpose.msra.mxu0 0.0
    %1653 = vmatprep.subr.mxu0 0.0
    %1654 = vmatpush1.xpose.msra.mxu0 0.0
    %1655 = vmatprep.subr.mxu0 0.0
    %1656 = vmatpush1.xpose.msra.mxu0 0.0
    %1657 = vmatprep.subr.mxu0 0.0
    %1658 = vmatpush1.xpose.msra.mxu0 0.0
    %1659 = vmatprep.subr.mxu0 0.0
    %1660 = vmatpush1.xpose.msra.mxu0 0.0
    %1661 = vmatprep.subr.mxu0 0.0
    %1662 = vmatpush1.xpose.msra.mxu0 0.0
    %1663 = vmatprep.subr.mxu0 0.0
    %1664 = vmatpush1.xpose.msra.mxu0 0.0
    %1665 = vmatprep.subr.mxu0 0.0
    %1666 = vmatpush1.xpose.msra.mxu0 0.0
    %1667 = vmatprep.subr.mxu0 0.0
    %1668 = vmatpush1.xpose.msra.mxu0 0.0
    %1669 = vmatprep.subr.mxu0 0.0
    %1670 = vmatpush1.xpose.msra.mxu0 0.0
    %1671 = vmatprep.subr.mxu0 0.0
    %1672 = vmatpush1.xpose.msra.mxu0 0.0
    %1673 = vmatprep.subr.mxu0 0.0
    %1674 = vmatpush1.xpose.msra.mxu0 0.0
    %1675 = vmatprep.subr.mxu0 0.0
    %1676 = vmatpush1.xpose.msra.mxu0 0.0
    %1677 = vmatprep.subr.mxu0 0.0
    %1678 = vmatpush1.xpose.msra.mxu0 0.0
    %1679 = vmatprep.subr.mxu0 0.0
    %1680 = vmatpush1.xpose.msra.mxu0 0.0
    %1681 = vmatprep.subr.mxu0 0.0
    %1682 = vmatpush1.xpose.msra.mxu0 0.0
    %1683 = vmatprep.subr.mxu0 0.0
    %1684 = vmatpush1.xpose.msra.mxu0 0.0
    %1685 = vmatprep.subr.mxu0 0.0
    %1686 = vmatpush1.xpose.msra.mxu0 0.0
    %1687 = vmatprep.subr.mxu0 0.0
    %1688 = vmatpush1.xpose.msra.mxu0 0.0
    %1689 = vmatprep.subr.mxu0 0.0
    %1690 = vmatpush1.xpose.msra.mxu0 0.0
    %1691 = vmatprep.subr.mxu0 0.0
    %1692 = vmatpush1.xpose.msra.mxu0 0.0
    %1693 = vmatprep.subr.mxu0 0.0
    %1694 = vmatpush1.xpose.msra.mxu0 0.0
    %1695 = vmatprep.subr.mxu0 0.0
    %1696 = vmatpush1.xpose.msra.mxu0 0.0
    %1697 = vmatprep.subr.mxu0 0.0
    %1698 = vmatpush1.xpose.msra.mxu0 0.0
    %1699 = vmatprep.subr.mxu0 0.0
    %1700 = vmatpush1.xpose.msra.mxu0 0.0
    %1701 = vmatprep.mubr.f32.mxu0 0.0
    %1702 = vmatmul.mubr.f32.gmra.mrb[0].mxu0 %v1629
    %v1703 = vpop.f32.mrb[0].mxu0
    %v1704 = vadd.f32 0.0, %v1703
    %v1705 = vpop.f32.mrb[0].mxu0
    %1706 = vmatprep.mubr.f32.mxu0 0.0
    %1707 = vmatmul.mubr.f32.gmra.mrb[0].mxu0 %v1631
    %v1708 = vpop.f32.mrb[0].mxu0
    %v1709 = vadd.f32 0.0, %v1708
    %v1710 = vpop.f32.mrb[0].mxu0
    %1711 = vdwg.mxu0
    %1712 = vrot.lane.b32.xlu0 %v224, 80
    %v1713 = vpop.permute.xlu0 %1712
    %1714 = vrot.lane.b32.xlu0 %v229, 80
    %v1715 = vpop.permute.xlu0 %1714
    %1716 = vrot.lane.b32.xlu0 %v326, 80
    %v1717 = vpop.permute.xlu0 %1716
    %1718 = vrot.lane.b32.xlu0 %v331, 80
    %v1719 = vpop.permute.xlu0 %1718
    %v1720 = vsel %vm436, %v1713, 0
    %v1722 = vsel %vm436, %v1715, 0
    %v1724 = vsel %vm436, %v1717, 0
    %v1726 = vsel %vm436, %v1719, 0
    %1728 = vmatprep.subr.mxu0 0.0
    %1729 = vmatpush1.xpose.msra.mxu0 %v1724
    %1730 = vmatprep.subr.mxu0 0.0
    %1731 = vmatpush1.xpose.msra.mxu0 %v1726
    %1732 = vmatprep.subr.mxu0 0.0
    %1733 = vmatpush1.xpose.msra.mxu0 0.0
    %1734 = vmatprep.subr.mxu0 0.0
    %1735 = vmatpush1.xpose.msra.mxu0 0.0
    %1736 = vmatprep.subr.mxu0 0.0
    %1737 = vmatpush1.xpose.msra.mxu0 0.0
    %1738 = vmatprep.subr.mxu0 0.0
    %1739 = vmatpush1.xpose.msra.mxu0 0.0
    %1740 = vmatprep.subr.mxu0 0.0
    %1741 = vmatpush1.xpose.msra.mxu0 0.0
    %1742 = vmatprep.subr.mxu0 0.0
    %1743 = vmatpush1.xpose.msra.mxu0 0.0
    %1744 = vmatprep.subr.mxu0 0.0
    %1745 = vmatpush1.xpose.msra.mxu0 0.0
    %1746 = vmatprep.subr.mxu0 0.0
    %1747 = vmatpush1.xpose.msra.mxu0 0.0
    %1748 = vmatprep.subr.mxu0 0.0
    %1749 = vmatpush1.xpose.msra.mxu0 0.0
    %1750 = vmatprep.subr.mxu0 0.0
    %1751 = vmatpush1.xpose.msra.mxu0 0.0
    %1752 = vmatprep.subr.mxu0 0.0
    %1753 = vmatpush1.xpose.msra.mxu0 0.0
    %1754 = vmatprep.subr.mxu0 0.0
    %1755 = vmatpush1.xpose.msra.mxu0 0.0
    %1756 = vmatprep.subr.mxu0 0.0
    %1757 = vmatpush1.xpose.msra.mxu0 0.0
    %1758 = vmatprep.subr.mxu0 0.0
    %1759 = vmatpush1.xpose.msra.mxu0 0.0
    %1760 = vmatprep.subr.mxu0 0.0
    %1761 = vmatpush1.xpose.msra.mxu0 0.0
    %1762 = vmatprep.subr.mxu0 0.0
    %1763 = vmatpush1.xpose.msra.mxu0 0.0
    %1764 = vmatprep.subr.mxu0 0.0
    %1765 = vmatpush1.xpose.msra.mxu0 0.0
    %1766 = vmatprep.subr.mxu0 0.0
    %1767 = vmatpush1.xpose.msra.mxu0 0.0
    %1768 = vmatprep.subr.mxu0 0.0
    %1769 = vmatpush1.xpose.msra.mxu0 0.0
    %1770 = vmatprep.subr.mxu0 0.0
    %1771 = vmatpush1.xpose.msra.mxu0 0.0
    %1772 = vmatprep.subr.mxu0 0.0
    %1773 = vmatpush1.xpose.msra.mxu0 0.0
    %1774 = vmatprep.subr.mxu0 0.0
    %1775 = vmatpush1.xpose.msra.mxu0 0.0
    %1776 = vmatprep.subr.mxu0 0.0
    %1777 = vmatpush1.xpose.msra.mxu0 0.0
    %1778 = vmatprep.subr.mxu0 0.0
    %1779 = vmatpush1.xpose.msra.mxu0 0.0
    %1780 = vmatprep.subr.mxu0 0.0
    %1781 = vmatpush1.xpose.msra.mxu0 0.0
    %1782 = vmatprep.subr.mxu0 0.0
    %1783 = vmatpush1.xpose.msra.mxu0 0.0
    %1784 = vmatprep.subr.mxu0 0.0
    %1785 = vmatpush1.xpose.msra.mxu0 0.0
    %1786 = vmatprep.subr.mxu0 0.0
    %1787 = vmatpush1.xpose.msra.mxu0 0.0
    %1788 = vmatprep.subr.mxu0 0.0
    %1789 = vmatpush1.xpose.msra.mxu0 0.0
    %1790 = vmatprep.subr.mxu0 0.0
    %1791 = vmatpush1.xpose.msra.mxu0 0.0
    %1792 = vmatprep.mubr.f32.mxu0 0.0
    %1793 = vmatmul.mubr.f32.gmra.mrb[0].mxu0 %v1720
    %v1794 = vpop.f32.mrb[0].mxu0
    %v1795 = vadd.f32 0.0, %v1794
    %v1796 = vpop.f32.mrb[0].mxu0
    %1797 = vmatprep.mubr.f32.mxu0 0.0
    %1798 = vmatmul.mubr.f32.gmra.mrb[0].mxu0 %v1722
    %v1799 = vpop.f32.mrb[0].mxu0
    %v1800 = vadd.f32 0.0, %v1799
    %v1801 = vpop.f32.mrb[0].mxu0
    %1802 = vdwg.mxu0
    %v1803 = vsel %vm436, %v1704, -inf
    %1804 = vmax.xlane.f32.xlu0 %v1803
    %v1805 = vpop.xlane.xlu0 %1804
    %v1806 = vsel %vm436, %v1709, -inf
    %1807 = vmax.xlane.f32.xlu0 %v1806
    %v1808 = vpop.xlane.xlu0 %1807
    %v1809 = vsel %vm436, %v1795, -inf
    %1810 = vmax.xlane.f32.xlu0 %v1809
    %v1811 = vpop.xlane.xlu0 %1810
    %v1812 = vsel %vm436, %v1800, -inf
    %1813 = vmax.xlane.f32.xlu0 %v1812
    %v1814 = vpop.xlane.xlu0 %1813
    %v1815 = vsub.f32 %v1704, %v1805
    %v1816 = vsub.f32 %v1709, %v1808
    %v1817 = vsub.f32 %v1795, %v1811
    %v1818 = vsub.f32 %v1800, %v1814
    %v1819 = vmul.f32 %v1815, 1.442695
    %v1820 = vpow.pop %v1819
    %v1821 = vmul.f32 %v1816, 1.442695
    %v1822 = vpow.pop %v1821
    %v1823 = vmul.f32 %v1817, 1.442695
    %v1824 = vpow.pop %v1823
    %v1825 = vmul.f32 %v1818, 1.442695
    %v1826 = vpow.pop %v1825
    %v1827 = vsel %vm436, %v1820, 0.0
    %1828 = vadd.xlane.f32.xlu0 %v1827
    %v1829 = vpop.xlane.xlu0 %1828
    %v1830 = vsel %vm436, %v1822, 0.0
    %1831 = vadd.xlane.f32.xlu0 %v1830
    %v1832 = vpop.xlane.xlu0 %1831
    %v1833 = vsel %vm436, %v1824, 0.0
    %1834 = vadd.xlane.f32.xlu0 %v1833
    %v1835 = vpop.xlane.xlu0 %1834
    %v1836 = vsel %vm436, %v1826, 0.0
    %1837 = vadd.xlane.f32.xlu0 %v1836
    %v1838 = vpop.xlane.xlu0 %1837
    %v1839 = vrcp.pop %v1829
    %v1840 = vrcp.pop %v1832
    %v1841 = vrcp.pop %v1835
    %v1842 = vrcp.pop %v1838
    %v1843 = vmul.f32 %v1820, %v1839
    %v1844 = vmul.f32 %v1822, %v1840
    %v1845 = vmul.f32 %v1824, %v1841
    %v1846 = vmul.f32 %v1826, %v1842
    %1847 = vrot.lane.b32.xlu0 %v418, 80
    %v1848 = vpop.permute.xlu0 %1847
    %1849 = vrot.lane.b32.xlu0 %v423, 80
    %v1850 = vpop.permute.xlu0 %1849
    %v1854 = vsel %vm436, %v1843, 0
    %v1857 = vsel %vm436, %v1844, 0
    %1859 = vmatprep.subr.mxu0 0.0
    %1860 = vmatpush1.msra.mxu0 %v1848
    %1861 = vmatprep.subr.mxu0 0.0
    %1862 = vmatpush1.msra.mxu0 %v1850
    %1863 = vmatprep.subr.mxu0 0.0
    %1864 = vmatpush1.msra.mxu0 0.0
    %1865 = vmatprep.subr.mxu0 0.0
    %1866 = vmatpush1.msra.mxu0 0.0
    %1867 = vmatprep.subr.mxu0 0.0
    %1868 = vmatpush1.msra.mxu0 0.0
    %1869 = vmatprep.subr.mxu0 0.0
    %1870 = vmatpush1.msra.mxu0 0.0
    %1871 = vmatprep.subr.mxu0 0.0
    %1872 = vmatpush1.msra.mxu0 0.0
    %1873 = vmatprep.subr.mxu0 0.0
    %1874 = vmatpush1.msra.mxu0 0.0
    %1875 = vmatprep.subr.mxu0 0.0
    %1876 = vmatpush1.msra.mxu0 0.0
    %1877 = vmatprep.subr.mxu0 0.0
    %1878 = vmatpush1.msra.mxu0 0.0
    %1879 = vmatprep.subr.mxu0 0.0
    %1880 = vmatpush1.msra.mxu0 0.0
    %1881 = vmatprep.subr.mxu0 0.0
    %1882 = vmatpush1.msra.mxu0 0.0
    %1883 = vmatprep.subr.mxu0 0.0
    %1884 = vmatpush1.msra.mxu0 0.0
    %1885 = vmatprep.subr.mxu0 0.0
    %1886 = vmatpush1.msra.mxu0 0.0
    %1887 = vmatprep.subr.mxu0 0.0
    %1888 = vmatpush1.msra.mxu0 0.0
    %1889 = vmatprep.subr.mxu0 0.0
    %1890 = vmatpush1.msra.mxu0 0.0
    %1891 = vmatprep.subr.mxu0 0.0
    %1892 = vmatpush1.msra.mxu0 0.0
    %1893 = vmatprep.subr.mxu0 0.0
    %1894 = vmatpush1.msra.mxu0 0.0
    %1895 = vmatprep.subr.mxu0 0.0
    %1896 = vmatpush1.msra.mxu0 0.0
    %1897 = vmatprep.subr.mxu0 0.0
    %1898 = vmatpush1.msra.mxu0 0.0
    %1899 = vmatprep.subr.mxu0 0.0
    %1900 = vmatpush1.msra.mxu0 0.0
    %1901 = vmatprep.subr.mxu0 0.0
    %1902 = vmatpush1.msra.mxu0 0.0
    %1903 = vmatprep.subr.mxu0 0.0
    %1904 = vmatpush1.msra.mxu0 0.0
    %1905 = vmatprep.subr.mxu0 0.0
    %1906 = vmatpush1.msra.mxu0 0.0
    %1907 = vmatprep.subr.mxu0 0.0
    %1908 = vmatpush1.msra.mxu0 0.0
    %1909 = vmatprep.subr.mxu0 0.0
    %1910 = vmatpush1.msra.mxu0 0.0
    %1911 = vmatprep.subr.mxu0 0.0
    %1912 = vmatpush1.msra.mxu0 0.0
    %1913 = vmatprep.subr.mxu0 0.0
    %1914 = vmatpush1.msra.mxu0 0.0
    %1915 = vmatprep.subr.mxu0 0.0
    %1916 = vmatpush1.msra.mxu0 0.0
    %1917 = vmatprep.subr.mxu0 0.0
    %1918 = vmatpush1.msra.mxu0 0.0
    %1919 = vmatprep.subr.mxu0 0.0
    %1920 = vmatpush1.msra.mxu0 0.0
    %1921 = vmatprep.subr.mxu0 0.0
    %1922 = vmatpush1.msra.mxu0 0.0
    %1923 = vmatprep.mubr.f32.mxu0 0.0
    %1924 = vmatmul.mubr.f32.gmra.mrb[0].mxu0 %v1854
    %v1925 = vpop.f32.mrb[0].mxu0
    %v1926 = vadd.f32 0.0, %v1925
    %v1927 = vpop.f32.mrb[0].mxu0
    %1928 = vmatprep.mubr.f32.mxu0 0.0
    %1929 = vmatmul.mubr.f32.gmra.mrb[0].mxu0 %v1857
    %v1930 = vpop.f32.mrb[0].mxu0
    %v1931 = vadd.f32 0.0, %v1930
    %v1932 = vpop.f32.mrb[0].mxu0
    %1933 = vdwg.mxu0
    %1934 = vrot.lane.b32.xlu0 %v428, 80
    %v1935 = vpop.permute.xlu0 %1934
    %1936 = vrot.lane.b32.xlu0 %v433, 80
    %v1937 = vpop.permute.xlu0 %1936
    %v1941 = vsel %vm436, %v1845, 0
    %v1944 = vsel %vm436, %v1846, 0
    %1946 = vmatprep.subr.mxu0 0.0
    %1947 = vmatpush1.msra.mxu0 %v1935
    %1948 = vmatprep.subr.mxu0 0.0
    %1949 = vmatpush1.msra.mxu0 %v1937
    %1950 = vmatprep.subr.mxu0 0.0
    %1951 = vmatpush1.msra.mxu0 0.0
    %1952 = vmatprep.subr.mxu0 0.0
    %1953 = vmatpush1.msra.mxu0 0.0
    %1954 = vmatprep.subr.mxu0 0.0
    %1955 = vmatpush1.msra.mxu0 0.0
    %1956 = vmatprep.subr.mxu0 0.0
    %1957 = vmatpush1.msra.mxu0 0.0
    %1958 = vmatprep.subr.mxu0 0.0
    %1959 = vmatpush1.msra.mxu0 0.0
    %1960 = vmatprep.subr.mxu0 0.0
    %1961 = vmatpush1.msra.mxu0 0.0
    %1962 = vmatprep.subr.mxu0 0.0
    %1963 = vmatpush1.msra.mxu0 0.0
    %1964 = vmatprep.subr.mxu0 0.0
    %1965 = vmatpush1.msra.mxu0 0.0
    %1966 = vmatprep.subr.mxu0 0.0
    %1967 = vmatpush1.msra.mxu0 0.0
    %1968 = vmatprep.subr.mxu0 0.0
    %1969 = vmatpush1.msra.mxu0 0.0
    %1970 = vmatprep.subr.mxu0 0.0
    %1971 = vmatpush1.msra.mxu0 0.0
    %1972 = vmatprep.subr.mxu0 0.0
    %1973 = vmatpush1.msra.mxu0 0.0
    %1974 = vmatprep.subr.mxu0 0.0
    %1975 = vmatpush1.msra.mxu0 0.0
    %1976 = vmatprep.subr.mxu0 0.0
    %1977 = vmatpush1.msra.mxu0 0.0
    %1978 = vmatprep.subr.mxu0 0.0
    %1979 = vmatpush1.msra.mxu0 0.0
    %1980 = vmatprep.subr.mxu0 0.0
    %1981 = vmatpush1.msra.mxu0 0.0
    %1982 = vmatprep.subr.mxu0 0.0
    %1983 = vmatpush1.msra.mxu0 0.0
    %1984 = vmatprep.subr.mxu0 0.0
    %1985 = vmatpush1.msra.mxu0 0.0
    %1986 = vmatprep.subr.mxu0 0.0
    %1987 = vmatpush1.msra.mxu0 0.0
    %1988 = vmatprep.subr.mxu0 0.0
    %1989 = vmatpush1.msra.mxu0 0.0
    %1990 = vmatprep.subr.mxu0 0.0
    %1991 = vmatpush1.msra.mxu0 0.0
    %1992 = vmatprep.subr.mxu0 0.0
    %1993 = vmatpush1.msra.mxu0 0.0
    %1994 = vmatprep.subr.mxu0 0.0
    %1995 = vmatpush1.msra.mxu0 0.0
    %1996 = vmatprep.subr.mxu0 0.0
    %1997 = vmatpush1.msra.mxu0 0.0
    %1998 = vmatprep.subr.mxu0 0.0
    %1999 = vmatpush1.msra.mxu0 0.0
    %2000 = vmatprep.subr.mxu0 0.0
    %2001 = vmatpush1.msra.mxu0 0.0
    %2002 = vmatprep.subr.mxu0 0.0
    %2003 = vmatpush1.msra.mxu0 0.0
    %2004 = vmatprep.subr.mxu0 0.0
    %2005 = vmatpush1.msra.mxu0 0.0
    %2006 = vmatprep.subr.mxu0 0.0
    %2007 = vmatpush1.msra.mxu0 0.0
    %2008 = vmatprep.subr.mxu0 0.0
    %2009 = vmatpush1.msra.mxu0 0.0
    %2010 = vmatprep.mubr.f32.mxu0 0.0
    %2011 = vmatmul.mubr.f32.gmra.mrb[0].mxu0 %v1941
    %v2012 = vpop.f32.mrb[0].mxu0
    %v2013 = vadd.f32 0.0, %v2012
    %v2014 = vpop.f32.mrb[0].mxu0
    %2015 = vmatprep.mubr.f32.mxu0 0.0
    %2016 = vmatmul.mubr.f32.gmra.mrb[0].mxu0 %v1944
    %v2017 = vpop.f32.mrb[0].mxu0
    %v2018 = vadd.f32 0.0, %v2017
    %v2019 = vpop.f32.mrb[0].mxu0
    %2020 = vdwg.mxu0
    %2025 = vrot.lane.b32.xlu0 %v1124, 16
    %v2026 = vpop.permute.xlu0 %2025
    %2027 = vrot.lane.b32.xlu0 %v1129, 16
    %v2028 = vpop.permute.xlu0 %2027
    %2029 = vrot.lane.b32.xlu0 %v1213, 16
    %v2030 = vpop.permute.xlu0 %2029
    %2031 = vrot.lane.b32.xlu0 %v1218, 16
    %v2032 = vpop.permute.xlu0 %2031
    %2041 = vrot.lane.b32.xlu0 %v1526, 32
    %v2042 = vpop.permute.xlu0 %2041
    %2043 = vrot.lane.b32.xlu0 %v1531, 32
    %v2044 = vpop.permute.xlu0 %2043
    %2045 = vrot.lane.b32.xlu0 %v1613, 32
    %v2046 = vpop.permute.xlu0 %2045
    %2047 = vrot.lane.b32.xlu0 %v1618, 32
    %v2048 = vpop.permute.xlu0 %2047
    %2057 = vrot.lane.b32.xlu0 %v1926, 48
    %v2058 = vpop.permute.xlu0 %2057
    %2059 = vrot.lane.b32.xlu0 %v1931, 48
    %v2060 = vpop.permute.xlu0 %2059
    %2061 = vrot.lane.b32.xlu0 %v2013, 48
    %v2062 = vpop.permute.xlu0 %2061
    %2063 = vrot.lane.b32.xlu0 %v2018, 48
    %v2064 = vpop.permute.xlu0 %2063
    %v2069 = vsel %vm436, %v728, %v2026
    %v2070 = vsel %vm436, %v733, %v2028
    %v2071 = vsel %vm436, %v809, %v2030
    %v2072 = vsel %vm436, %v814, %v2032
    %vm2073 = vcmask 261120
    %v2074 = vsel %vm2073, %v2069, %v2042
    %v2075 = vsel %vm2073, %v2070, %v2044
    %v2076 = vsel %vm2073, %v2071, %v2046
    %v2077 = vsel %vm2073, %v2072, %v2048
    %vm2078 = vcmask 392192
    %v2079 = vsel %vm2078, %v2074, %v2058
    %v2080 = vsel %vm2078, %v2075, %v2060
    %v2081 = vsel %vm2078, %v2076, %v2062
    %v2082 = vsel %vm2078, %v2077, %v2064
    %v2083 = vld [vmem:[#allocation7] sm:$0xff]
    %v2084 = vld [vmem:[#allocation7 + $0x8] sm:$0xff]
    %v2085 = vld [vmem:[#allocation7 + $0x10] sm:$0xff]
    %v2086 = vld [vmem:[#allocation7 + $0x18] sm:$0xff]
    %v2087 = vld [vmem:[#allocation7 + $0x20] sm:$0xff]
    %v2088 = vld [vmem:[#allocation7 + $0x28] sm:$0xff]
    %v2089 = vld [vmem:[#allocation7 + $0x30] sm:$0xff]
    %v2090 = vld [vmem:[#allocation7 + $0x38] sm:$0xff]
    %v2091 = vld [vmem:[%s4] sm:$0x1]
    %v2093 = vlaneseq
    %v2094 = vshrl.u32 %v2093, 7
    %v2095 = vsub.s32 0, %v2094
    %v2096 = vrot.slane %v2091, %v2095
    %v2099 = vsel %vm66, %v2079, 0
    %v2102 = vsel %vm66, %v2080, 0
    %v2105 = vsel %vm66, %v2081, 0
    %v2108 = vsel %vm66, %v2082, 0
    %2110 = vmatprep.subr.mxu0 0.0
    %2111 = vmatpush1.msra.mxu0 %v2083
    %2112 = vmatprep.subr.mxu0 0.0
    %2113 = vmatpush1.msra.mxu0 %v2084
    %2114 = vmatprep.subr.mxu0 0.0
    %2115 = vmatpush1.msra.mxu0 %v2085
    %2116 = vmatprep.subr.mxu0 0.0
    %2117 = vmatpush1.msra.mxu0 %v2086
    %2118 = vmatprep.subr.mxu0 0.0
    %2119 = vmatpush1.msra.mxu0 %v2087
    %2120 = vmatprep.subr.mxu0 0.0
    %2121 = vmatpush1.msra.mxu0 %v2088
    %2122 = vmatprep.subr.mxu0 0.0
    %2123 = vmatpush1.msra.mxu0 %v2089
    %2124 = vmatprep.subr.mxu0 0.0
    %2125 = vmatpush1.msra.mxu0 %v2090
    %2126 = vmatprep.subr.mxu0 0.0
    %2127 = vmatpush1.msra.mxu0 0.0
    %2128 = vmatprep.subr.mxu0 0.0
    %2129 = vmatpush1.msra.mxu0 0.0
    %2130 = vmatprep.subr.mxu0 0.0
    %2131 = vmatpush1.msra.mxu0 0.0
    %2132 = vmatprep.subr.mxu0 0.0
    %2133 = vmatpush1.msra.mxu0 0.0
    %2134 = vmatprep.subr.mxu0 0.0
    %2135 = vmatpush1.msra.mxu0 0.0
    %2136 = vmatprep.subr.mxu0 0.0
    %2137 = vmatpush1.msra.mxu0 0.0
    %2138 = vmatprep.subr.mxu0 0.0
    %2139 = vmatpush1.msra.mxu0 0.0
    %2140 = vmatprep.subr.mxu0 0.0
    %2141 = vmatpush1.msra.mxu0 0.0
    %2142 = vmatprep.subr.mxu0 0.0
    %2143 = vmatpush1.msra.mxu0 0.0
    %2144 = vmatprep.subr.mxu0 0.0
    %2145 = vmatpush1.msra.mxu0 0.0
    %2146 = vmatprep.subr.mxu0 0.0
    %2147 = vmatpush1.msra.mxu0 0.0
    %2148 = vmatprep.subr.mxu0 0.0
    %2149 = vmatpush1.msra.mxu0 0.0
    %2150 = vmatprep.subr.mxu0 0.0
    %2151 = vmatpush1.msra.mxu0 0.0
    %2152 = vmatprep.subr.mxu0 0.0
    %2153 = vmatpush1.msra.mxu0 0.0
    %2154 = vmatprep.subr.mxu0 0.0
    %2155 = vmatpush1.msra.mxu0 0.0
    %2156 = vmatprep.subr.mxu0 0.0
    %2157 = vmatpush1.msra.mxu0 0.0
    %2158 = vmatprep.subr.mxu0 0.0
    %2159 = vmatpush1.msra.mxu0 0.0
    %2160 = vmatprep.subr.mxu0 0.0
    %2161 = vmatpush1.msra.mxu0 0.0
    %2162 = vmatprep.subr.mxu0 0.0
    %2163 = vmatpush1.msra.mxu0 0.0
    %2164 = vmatprep.subr.mxu0 0.0
    %2165 = vmatpush1.msra.mxu0 0.0
    %2166 = vmatprep.subr.mxu0 0.0
    %2167 = vmatpush1.msra.mxu0 0.0
    %2168 = vmatprep.subr.mxu0 0.0
    %2169 = vmatpush1.msra.mxu0 0.0
    %2170 = vmatprep.subr.mxu0 0.0
    %2171 = vmatpush1.msra.mxu0 0.0
    %2172 = vmatprep.subr.mxu0 0.0
    %2173 = vmatpush1.msra.mxu0 0.0
    %2174 = vmatprep.mubr.f32.mxu0 0.0
    %2175 = vmatmul.mubr.f32.gmra.mrb[0].mxu0 %v2099
    %v2176 = vpop.f32.mrb[0].mxu0
    %v2177 = vadd.f32 %v2096, %v2176
    %v2178 = vpop.f32.mrb[0].mxu0
    %2179 = vmatprep.mubr.f32.mxu0 0.0
    %2180 = vmatmul.mubr.f32.gmra.mrb[0].mxu0 %v2102
    %v2181 = vpop.f32.mrb[0].mxu0
    %v2182 = vadd.f32 %v2096, %v2181
    %v2183 = vpop.f32.mrb[0].mxu0
    %2184 = vmatprep.mubr.f32.mxu0 0.0
    %2185 = vmatmul.mubr.f32.gmra.mrb[0].mxu0 %v2105
    %v2186 = vpop.f32.mrb[0].mxu0
    %v2187 = vadd.f32 %v2096, %v2186
    %v2188 = vpop.f32.mrb[0].mxu0
    %2189 = vmatprep.mubr.f32.mxu0 0.0
    %2190 = vmatmul.mubr.f32.gmra.mrb[0].mxu0 %v2108
    %v2191 = vpop.f32.mrb[0].mxu0
    %v2192 = vadd.f32 %v2096, %v2191
    %v2193 = vpop.f32.mrb[0].mxu0
    %2194 = vdwg.mxu0
    %2195 = vst.msk [vmem:[#allocation8] sm:$0xff] %vm66, %v2177
    %2196 = vst.msk [vmem:[#allocation8 + $0x8] sm:$0xff] %vm66, %v2182
    %2197 = vst.msk [vmem:[#allocation8 + $0x10] sm:$0xff] %vm66, %v2187
    %2198 = vst.msk [vmem:[#allocation8 + $0x18] sm:$0xff] %vm66, %v2192
    // Predicated region
    $region34: #{tpu_custom_call.1} parent=1 // pred_check
      _
    $region35: #{tpu_custom_call.1} parent=1 // pred_check_branch
      %2200 = sbr.rel (0) target = $region37
    $region36: #{tpu_custom_call.1} parent=1 // pred_region
      %s2202 = ssub.s32 512, 512
      %2203 = vsyncadd [#allocation4], %s2202
      %s2204 = sshll.u32 [#allocation8], 4
      %s2205 = int_to_ptr.vmem [resolvable:$true] %s2204
      %2210 = dma.vmem_to_hbm [thread:$0]  %s2205, 512, %s5, [#allocation4], 128, 128, 8
    $region37: #{tpu_custom_call.1} parent=1 // pred_fallthru
      _
    // Predicated region
    $region38: #{tpu_custom_call.1} parent=1 // pred_check
      _
    $region39: #{tpu_custom_call.1} parent=1 // pred_check_branch
      %2212 = sbr.rel (0) target = $region41
    $region40: #{tpu_custom_call.1} parent=1 // pred_region
      %2213 = dma.done [#allocation4], 512
    $region41: #{tpu_custom_call.1} parent=1 // pred_fallthru
      _
    %2214 = vsyncpa [#allocation3], 1
    %2215 = vsyncpa [#allocation6], 1
    %2216 = vsyncpa [#allocation4], 1

</llo_original>
